<compile_context>
chip_gen: v5e
topology: v5e:2x2
jax: 0.10.0
libtpu: 0.0.40
codegen_flags: <defaults>
</compile_context>

<pallas_src>
import functools

import numpy as np
import jax
import jax.numpy as jnp
from jax import lax
from jax.experimental import pallas as pl
from jax.experimental.pallas import tpu as pltpu


# ----------------------------------------------------------------------------
# Recurrent + max-pool kernel.  One grid step = (direction d, block of T_BLK
# timesteps).  gates_x (precomputed x@W_ih^T + b) is streamed per block; W_hh
# and lens are block-resident; (h, c) live in VMEM scratch; the pooled running
# max lives directly in the (resident) output block.
# ----------------------------------------------------------------------------
def blstm_pool_kernel(gates_ref, w_hh_ref, len_ref, out_ref, h_ref, c_ref,
                      *, t_blk, t_real, t_pad, h_pad):
    d = pl.program_id(0)          # 0 = forward, 1 = backward (time-reversed gates)
    tb = pl.program_id(1)         # time-block index

    @pl.when(tb == 0)
    def _init():
        h_ref[...] = jnp.zeros_like(h_ref)
        c_ref[...] = jnp.zeros_like(c_ref)
        out_ref[...] = jnp.full(out_ref.shape, -jnp.inf, out_ref.dtype)

    lens = len_ref[...]           # (Bp, 1) int32
    w_hh = w_hh_ref[0]            # (Hp, 4Hp), bf16 (or f32), loop-invariant
    base = tb * t_blk

    def step(i, carry):
        h, c, m = carry
        # h @ W_hh on the MXU (bf16 inputs, f32 accumulation); x-projection is
        # already folded into gates_ref (streamed in compute dtype, used in f32).
        g = gates_ref[0, i].astype(jnp.float32) + jnp.dot(
            h.astype(w_hh.dtype), w_hh, preferred_element_type=jnp.float32)
        i_g = jax.nn.sigmoid(g[:, 0 * h_pad:1 * h_pad])
        f_g = jax.nn.sigmoid(g[:, 1 * h_pad:2 * h_pad])
        g_g = jnp.tanh(g[:, 2 * h_pad:3 * h_pad])
        o_g = jax.nn.sigmoid(g[:, 3 * h_pad:4 * h_pad])
        c_new = f_g * c + i_g * g_g
        h_new = o_g * jnp.tanh(c_new)

        s = base + i
        # Forward direction processes original time t == s; backward direction
        # (gates were time-reversed in the wrapper) processes t == t_real-1-s.
        t_orig = jnp.where(d == 0, s, t_real - 1 - s)
        valid = (t_orig >= 0) & (t_orig < lens)          # (Bp, 1) bool

        # Freeze (h, c) outside the valid range (pack_padded_sequence semantics;
        # also makes the reverse pass start from zero state at t = len-1).
        h = jnp.where(valid, h_new, h)
        c = jnp.where(valid, c_new, c)

        # pad_packed_sequence yields zeros past each sequence end and InferSent
        # max-pools over them too, so padded-but-real timesteps contribute 0;
        # timesteps beyond the real T (block padding) must contribute nothing.
        contrib = jnp.where(valid, h_new, jnp.zeros_like(h_new))
        m_new = jnp.maximum(m, contrib)
        if t_pad != t_real:                    # static: only needed if T % T_BLK != 0
            m_new = jnp.where(s < t_real, m_new, m)
        return h, c, m_new

    h, c, m = lax.fori_loop(0, t_blk, step,
                            (h_ref[...], c_ref[...], out_ref[0]),
                            unroll=True)
    h_ref[...] = h
    c_ref[...] = c
    out_ref[0] = m


# ----------------------------------------------------------------------------
# Weight / shape preparation helpers (gate order i | f | g | o, PyTorch layout).
# ----------------------------------------------------------------------------
def _round_up(x, m):
    return (x + m - 1) // m * m


def _pad_gate_rows(w, h, h_pad):
    """(4H, X) -> (4*H_pad, X), padding each gate chunk independently."""
    x = w.shape[1]
    w4 = jnp.pad(w.reshape(4, h, x), ((0, 0), (0, h_pad - h), (0, 0)))
    return w4.reshape(4 * h_pad, x)


def _pad_gate_vec(b, h, h_pad):
    """(4H,) -> (4*H_pad,), padding each gate chunk independently."""
    b4 = jnp.pad(b.reshape(4, h), ((0, 0), (0, h_pad - h)))
    return b4.reshape(4 * h_pad)


def _prep_w_hh(w_hh, h, h_pad, dtype):
    """(4H, H) -> (H_pad, 4*H_pad) with zero padding, transposed for h @ W."""
    w = _pad_gate_rows(jnp.asarray(w_hh, jnp.float32), h, h_pad)   # (4Hp, H)
    w = jnp.pad(w, ((0, 0), (0, h_pad - h)))                       # (4Hp, Hp)
    return w.T.astype(dtype)                                       # (Hp, 4Hp)


# ----------------------------------------------------------------------------
# Wrapper: BLSTMEncoder.forward((sent, sent_len)) with pool_type='max'.
# ----------------------------------------------------------------------------
def blstm_encoder(sent, sent_len, params, *, pool_type='max', t_blk=4,
                  compute_dtype=jnp.bfloat16):
    if pool_type != 'max':
        # TODO(synk): pool_type='mean' (running sum / len) not implemented;
        # the InferSent default config uses 'max'.
        raise NotImplementedError("only pool_type='max' is implemented")

    sent = jnp.asarray(sent, jnp.float32)
    T, B, E = sent.shape
    H = params['w_hh_f'].shape[1]

    Bp = _round_up(B, 8)
    Hp = _round_up(H, 128)
    G = 4 * Hp
    Tp = _round_up(T, t_blk)

    sent_p = jnp.pad(sent, ((0, 0), (0, Bp - B), (0, 0)))           # (T, Bp, E)
    lens_p = jnp.pad(jnp.asarray(sent_len, jnp.int32), (0, Bp - B)).reshape(Bp, 1)

    # --- Hoisted input projection: one dense matmul per direction (XLA/MXU). ---
    def project(w_ih, b_ih, b_hh):
        w = _pad_gate_rows(jnp.asarray(w_ih, jnp.float32), H, Hp)   # (G, E)
        b = _pad_gate_vec(jnp.asarray(b_ih, jnp.float32)
                          + jnp.asarray(b_hh, jnp.float32), H, Hp)  # (G,)
        g = sent_p.reshape(T * Bp, E) @ w.T + b                     # (T*Bp, G) f32
        return g.reshape(T, Bp, G).astype(compute_dtype)

    gx_f = project(params['w_ih_f'], params['b_ih_f'], params['b_hh_f'])
    gx_r = project(params['w_ih_r'], params['b_ih_r'], params['b_hh_r'])
    gx_r = jnp.flip(gx_r, axis=0)            # step s of bwd pass <-> time T-1-s
    gates = jnp.stack([gx_f, gx_r], axis=0)                         # (2, T, Bp, G)
    gates = jnp.pad(gates, ((0, 0), (0, Tp - T), (0, 0), (0, 0)))   # (2, Tp, Bp, G)

    w_hh = jnp.stack([_prep_w_hh(params['w_hh_f'], H, Hp, compute_dtype),
                      _prep_w_hh(params['w_hh_r'], H, Hp, compute_dtype)],
                     axis=0)                                        # (2, Hp, G)

    pooled = pl.pallas_call(
        functools.partial(blstm_pool_kernel, t_blk=t_blk, t_real=T, t_pad=Tp,
                          h_pad=Hp),
        out_shape=jax.ShapeDtypeStruct((2, Bp, Hp), jnp.float32),
        grid_spec=pltpu.PrefetchScalarGridSpec(
            num_scalar_prefetch=0,
            grid=(2, Tp // t_blk),
            in_specs=[
                # per-direction, per-time-block slab of precomputed gates (streamed)
                pl.BlockSpec((1, t_blk, Bp, G), lambda d, tb: (d, tb, 0, 0)),
                # per-direction W_hh, resident across the time axis
                pl.BlockSpec((1, Hp, G), lambda d, tb: (d, 0, 0)),
                # lengths, resident
                pl.BlockSpec((Bp, 1), lambda d, tb: (0, 0)),
            ],
            # constant index over the time axis -> resident running-max accumulator
            out_specs=pl.BlockSpec((1, Bp, Hp), lambda d, tb: (d, 0, 0)),
            scratch_shapes=[
                pltpu.VMEM((Bp, Hp), jnp.float32),   # h
                pltpu.VMEM((Bp, Hp), jnp.float32),   # c
            ],
        ),
        compiler_params=pltpu.CompilerParams(
            dimension_semantics=("parallel", "arbitrary"),
            vmem_limit_bytes=32 * 1024 * 1024,
        ),
    )(gates, w_hh, lens_p)

    # Un-pad and concatenate [forward ; backward] features.
    return jnp.concatenate([pooled[0, :B, :H], pooled[1, :B, :H]], axis=1)


# ----------------------------------------------------------------------------
# Pure-JAX reference (f32 everywhere), mirroring the PyTorch packed-BiLSTM
# + max-pool semantics.
# ----------------------------------------------------------------------------
def blstm_encoder_ref(sent, sent_len, params, pool_type='max'):
    assert pool_type == 'max'
    sent = jnp.asarray(sent, jnp.float32)
    T, B, E = sent.shape
    H = params['w_hh_f'].shape[1]
    lens = jnp.asarray(sent_len, jnp.int32).reshape(B, 1)

    def run_dir(w_ih, w_hh, b_ih, b_hh, reverse):
        def cell(carry, xt_t):
            h, c = carry
            x_t, t = xt_t
            gates = x_t @ w_ih.T + h @ w_hh.T + b_ih + b_hh
            i = jax.nn.sigmoid(gates[:, 0:H])
            f = jax.nn.sigmoid(gates[:, H:2 * H])
            g = jnp.tanh(gates[:, 2 * H:3 * H])
            o = jax.nn.sigmoid(gates[:, 3 * H:4 * H])
            c_new = f * c + i * g
            h_new = o * jnp.tanh(c_new)
            valid = t < lens
            h = jnp.where(valid, h_new, h)
            c = jnp.where(valid, c_new, c)
            out = jnp.where(valid, h_new, 0.0)   # pad_packed_sequence zeros
            return (h, c), out

        ts = jnp.arange(T, dtype=jnp.int32)
        xs = (sent[::-1], ts[::-1]) if reverse else (sent, ts)
        init = (jnp.zeros((B, H), jnp.float32), jnp.zeros((B, H), jnp.float32))
        _, outs = lax.scan(cell, init, xs)
        return outs[::-1] if reverse else outs   # (T, B, H)

    out_f = run_dir(params['w_ih_f'], params['w_hh_f'],
                    params['b_ih_f'], params['b_hh_f'], reverse=False)
    out_r = run_dir(params['w_ih_r'], params['w_hh_r'],
                    params['b_ih_r'], params['b_hh_r'], reverse=True)
    out = jnp.concatenate([out_f, out_r], axis=-1)   # (T, B, 2H)
    return jnp.max(out, axis=0)                      # max includes padded zeros


if __name__ == "__main__":
    # config: word_emb_dim=16, enc_lstm_dim=32, bsize=4, seq=8, pool_type='max'
    T, B, E, H = 8, 4, 16, 32

    key = jax.random.PRNGKey(0)
    ks = jax.random.split(key, 9)

    sent = jax.random.normal(ks[0], (T, B, E), dtype=jnp.float32)
    sent_len = jnp.array([8, 3, 5, 2], dtype=jnp.int32)

    # PyTorch nn.LSTM init: uniform(-1/sqrt(H), 1/sqrt(H)), gate order (i, f, g, o);
    # *_f = forward direction (l0), *_r = reverse direction (l0_reverse).
    bound = 1.0 / np.sqrt(H)

    def u(k, shape):
        return jax.random.uniform(k, shape, jnp.float32, -bound, bound)

    params = dict(
        w_ih_f=u(ks[1], (4 * H, E)), w_hh_f=u(ks[2], (4 * H, H)),
        b_ih_f=u(ks[3], (4 * H,)),   b_hh_f=u(ks[4], (4 * H,)),
        w_ih_r=u(ks[5], (4 * H, E)), w_hh_r=u(ks[6], (4 * H, H)),
        b_ih_r=u(ks[7], (4 * H,)),   b_hh_r=u(ks[8], (4 * H,)),
    )

    ref = jax.block_until_ready(blstm_encoder_ref(sent, sent_len, params))

    # Exactness check: f32 weights + f32 streamed gates.
    emb_f32 = jax.block_until_ready(
        blstm_encoder(sent, sent_len, params, compute_dtype=jnp.float32))
    np.testing.assert_allclose(np.asarray(emb_f32), np.asarray(ref),
                               rtol=1e-4, atol=1e-5)

    # Default performance path: bf16 W_hh / h / streamed gates on the MXU,
    # f32 accumulation and elementwise math.
    emb = jax.block_until_ready(blstm_encoder(sent, sent_len, params))
    np.testing.assert_allclose(np.asarray(emb), np.asarray(ref),
                               rtol=5e-2, atol=5e-2)

    assert emb.shape == (B, 2 * H)
    print("KERNEL_OK")
</pallas_src>

<mosaic_0001>
module attributes {stable_mosaic.version = 11 : i64} {
  func.func @blstm_pool_kernel(%arg0: i32, %arg1: i32, %arg2: memref<1x4x8x512xf32, #tpu.memory_space<vmem>>, %arg3: memref<1x128x512xf32, #tpu.memory_space<vmem>>, %arg4: memref<8x1xi32, #tpu.memory_space<vmem>>, %arg5: memref<1x8x128xf32, #tpu.memory_space<vmem>>, %arg6: memref<8x128xf32, #tpu.memory_space<vmem>>, %arg7: memref<8x128xf32, #tpu.memory_space<vmem>>) attributes {dimension_semantics = [#tpu.dimension_semantics<parallel>, #tpu.dimension_semantics<arbitrary>], iteration_bounds = array<i64: 2, 2>, scalar_prefetch = 0 : i64, scratch_operands = 2 : i64, tpu.core_type = #tpu.core_type<tc>, window_params = [{transform_indices = @transform_0, window_bounds = array<i64: 1, 4, 8, 512>}, {transform_indices = @transform_1, window_bounds = array<i64: 1, 128, 512>}, {pipeline_mode = #tpu.pipeline_mode<synchronous>, transform_indices = @transform_2, window_bounds = array<i64: 8, 1>}, {transform_indices = @transform_3, window_bounds = array<i64: 1, 8, 128>}]} {
    %c0_i32 = arith.constant 0 : i32
    %0 = arith.cmpi eq, %arg1, %c0_i32 : i32
    %1 = arith.extui %0 : i1 to i32
    %c0_i32_0 = arith.constant 0 : i32
    %2 = arith.cmpi ne, %1, %c0_i32_0 : i32
    scf.if %2 {
      %cst_63 = arith.constant 0.000000e+00 : f32
      %216 = vector.broadcast %cst_63 : f32 to vector<8x128xf32>
      %c0_64 = arith.constant 0 : index
      %c0_65 = arith.constant 0 : index
      %217 = vector.load %arg6[%c0_64, %c0_65] : memref<8x128xf32, #tpu.memory_space<vmem>>, vector<8x128xf32>
      tpu.vector_store %arg6[%c0_64, %c0_65], %216 {strides = array<i32>} : memref<8x128xf32, #tpu.memory_space<vmem>>, vector<8x128xf32>,
      %cst_66 = arith.constant 0.000000e+00 : f32
      %218 = vector.broadcast %cst_66 : f32 to vector<8x128xf32>
      %c0_67 = arith.constant 0 : index
      %c0_68 = arith.constant 0 : index
      %219 = vector.load %arg7[%c0_67, %c0_68] : memref<8x128xf32, #tpu.memory_space<vmem>>, vector<8x128xf32>
      tpu.vector_store %arg7[%c0_67, %c0_68], %218 {strides = array<i32>} : memref<8x128xf32, #tpu.memory_space<vmem>>, vector<8x128xf32>,
      %cst_69 = arith.constant 0xFF800000 : f32
      %220 = vector.broadcast %cst_69 : f32 to vector<1x8x128xf32>
      %c0_70 = arith.constant 0 : index
      %c0_71 = arith.constant 0 : index
      %c0_72 = arith.constant 0 : index
      %221 = vector.load %arg5[%c0_70, %c0_71, %c0_72] : memref<1x8x128xf32, #tpu.memory_space<vmem>>, vector<1x8x128xf32>
      tpu.vector_store %arg5[%c0_70, %c0_71, %c0_72], %220 {strides = array<i32>} : memref<1x8x128xf32, #tpu.memory_space<vmem>>, vector<1x8x128xf32>,
    } else {
    }
    %c0 = arith.constant 0 : index
    %c0_1 = arith.constant 0 : index
    %3 = vector.load %arg4[%c0, %c0_1] : memref<8x1xi32, #tpu.memory_space<vmem>>, vector<8x1xi32>
    %c0_2 = arith.constant 0 : index
    %c0_3 = arith.constant 0 : index
    %c0_4 = arith.constant 0 : index
    %4 = vector.load %arg3[%c0_2, %c0_3, %c0_4] : memref<1x128x512xf32, #tpu.memory_space<vmem>>, vector<1x128x512xf32>
    %5 = vector.shape_cast %4 : vector<1x128x512xf32> to vector<128x512xf32>
    %c4_i32 = arith.constant 4 : i32
    %6 = arith.muli %arg1, %c4_i32 : i32
    %c0_5 = arith.constant 0 : index
    %c0_6 = arith.constant 0 : index
    %7 = vector.load %arg6[%c0_5, %c0_6] : memref<8x128xf32, #tpu.memory_space<vmem>>, vector<8x128xf32>
    %c0_7 = arith.constant 0 : index
    %c0_8 = arith.constant 0 : index
    %8 = vector.load %arg7[%c0_7, %c0_8] : memref<8x128xf32, #tpu.memory_space<vmem>>, vector<8x128xf32>
    %c0_9 = arith.constant 0 : index
    %c0_10 = arith.constant 0 : index
    %c0_11 = arith.constant 0 : index
    %9 = vector.load %arg5[%c0_9, %c0_10, %c0_11] : memref<1x8x128xf32, #tpu.memory_space<vmem>>, vector<1x8x128xf32>
    %10 = vector.shape_cast %9 : vector<1x8x128xf32> to vector<8x128xf32>
    %c0_i32_12 = arith.constant 0 : i32
    %c0_13 = arith.constant 0 : index
    %11 = arith.index_cast %c0_i32_12 : i32 to index
    %c0_14 = arith.constant 0 : index
    %c0_15 = arith.constant 0 : index
    %12 = vector.load %arg2[%c0_13, %11, %c0_14, %c0_15] : memref<1x4x8x512xf32, #tpu.memory_space<vmem>>, vector<1x1x8x512xf32>
    %13 = vector.shape_cast %12 : vector<1x1x8x512xf32> to vector<8x512xf32>
    %cst = arith.constant dense<0.000000e+00> : vector<8x512xf32>
    %14 = tpu.matmul %7, %5, %cst {dimension_numbers = #tpu.dot_dimension_numbers<[1], [0], [0], [1], [0, 0, 1, 1], [], []>} : vector<8x128xf32>, vector<128x512xf32>, vector<8x512xf32> -> vector<8x512xf32>
    %15 = arith.addf %13, %14 : vector<8x512xf32>
    %16 = vector.extract_strided_slice %15 {offsets = [0, 0], sizes = [8, 128], strides = [1, 1]} : vector<8x512xf32> to vector<8x128xf32>
    %17 = arith.negf %16 : vector<8x128xf32>
    %18 = math.exp %17 : vector<8x128xf32>
    %cst_16 = arith.constant 1.000000e+00 : f32
    %19 = vector.broadcast %cst_16 : f32 to vector<8x128xf32>
    %20 = arith.addf %19, %18 : vector<8x128xf32>
    %21 = arith.divf %19, %20 : vector<8x128xf32>
    %22 = vector.extract_strided_slice %15 {offsets = [0, 128], sizes = [8, 128], strides = [1, 1]} : vector<8x512xf32> to vector<8x128xf32>
    %23 = arith.negf %22 : vector<8x128xf32>
    %24 = math.exp %23 : vector<8x128xf32>
    %cst_17 = arith.constant 1.000000e+00 : f32
    %25 = vector.broadcast %cst_17 : f32 to vector<8x128xf32>
    %26 = arith.addf %25, %24 : vector<8x128xf32>
    %27 = arith.divf %25, %26 : vector<8x128xf32>
    %28 = vector.extract_strided_slice %15 {offsets = [0, 256], sizes = [8, 128], strides = [1, 1]} : vector<8x512xf32> to vector<8x128xf32>
    %29 = math.tanh %28 : vector<8x128xf32>
    %30 = vector.extract_strided_slice %15 {offsets = [0, 384], sizes = [8, 128], strides = [1, 1]} : vector<8x512xf32> to vector<8x128xf32>
    %31 = arith.negf %30 : vector<8x128xf32>
    %32 = math.exp %31 : vector<8x128xf32>
    %cst_18 = arith.constant 1.000000e+00 : f32
    %33 = vector.broadcast %cst_18 : f32 to vector<8x128xf32>
    %34 = arith.addf %33, %32 : vector<8x128xf32>
    %35 = arith.divf %33, %34 : vector<8x128xf32>
    %36 = arith.mulf %27, %8 : vector<8x128xf32>
    %37 = arith.mulf %21, %29 : vector<8x128xf32>
    %38 = arith.addf %36, %37 : vector<8x128xf32>
    %39 = math.tanh %38 : vector<8x128xf32>
    %40 = arith.mulf %35, %39 : vector<8x128xf32>
    %41 = arith.addi %6, %c0_i32_12 : i32
    %c0_i32_19 = arith.constant 0 : i32
    %42 = arith.cmpi eq, %arg0, %c0_i32_19 : i32
    %c7_i32 = arith.constant 7 : i32
    %43 = arith.subi %c7_i32, %41 : i32
    %44 = arith.select %42, %41, %43 : i32
    %c0_i32_20 = arith.constant 0 : i32
    %45 = arith.cmpi sge, %44, %c0_i32_20 : i32
    %46 = vector.broadcast %44 : i32 to vector<8x1xi32>
    %47 = arith.cmpi slt, %46, %3 : vector<8x1xi32>
    %48 = vector.broadcast %45 : i1 to vector<8x1xi1>
    %49 = arith.andi %48, %47 : vector<8x1xi1>
    %50 = vector.shape_cast %49 : vector<8x1xi1> to vector<8x1xi1>
    %51 = vector.broadcast %50 : vector<8x1xi1> to vector<8x128xi1>
    %52 = arith.select %51, %40, %7 : vector<8x128xi1>, vector<8x128xf32>
    %53 = vector.shape_cast %49 : vector<8x1xi1> to vector<8x1xi1>
    %54 = vector.broadcast %53 : vector<8x1xi1> to vector<8x128xi1>
    %55 = arith.select %54, %38, %8 : vector<8x128xi1>, vector<8x128xf32>
    %cst_21 = arith.constant 0.000000e+00 : f32
    %56 = vector.broadcast %cst_21 : f32 to vector<8x128xf32>
    %57 = vector.shape_cast %49 : vector<8x1xi1> to vector<8x1xi1>
    %58 = vector.broadcast %57 : vector<8x1xi1> to vector<8x128xi1>
    %59 = arith.select %58, %40, %56 : vector<8x128xi1>, vector<8x128xf32>
    %60 = arith.maximumf %10, %59 : vector<8x128xf32>
    %c1_i32 = arith.constant 1 : i32
    %c0_22 = arith.constant 0 : index
    %61 = arith.index_cast %c1_i32 : i32 to index
    %c0_23 = arith.constant 0 : index
    %c0_24 = arith.constant 0 : index
    %62 = vector.load %arg2[%c0_22, %61, %c0_23, %c0_24] : memref<1x4x8x512xf32, #tpu.memory_space<vmem>>, vector<1x1x8x512xf32>
    %63 = vector.shape_cast %62 : vector<1x1x8x512xf32> to vector<8x512xf32>
    %cst_25 = arith.constant dense<0.000000e+00> : vector<8x512xf32>
    %64 = tpu.matmul %52, %5, %cst_25 {dimension_numbers = #tpu.dot_dimension_numbers<[1], [0], [0], [1], [0, 0, 1, 1], [], []>} : vector<8x128xf32>, vector<128x512xf32>, vector<8x512xf32> -> vector<8x512xf32>
    %65 = arith.addf %63, %64 : vector<8x512xf32>
    %66 = vector.extract_strided_slice %65 {offsets = [0, 0], sizes = [8, 128], strides = [1, 1]} : vector<8x512xf32> to vector<8x128xf32>
    %67 = arith.negf %66 : vector<8x128xf32>
    %68 = math.exp %67 : vector<8x128xf32>
    %cst_26 = arith.constant 1.000000e+00 : f32
    %69 = vector.broadcast %cst_26 : f32 to vector<8x128xf32>
    %70 = arith.addf %69, %68 : vector<8x128xf32>
    %71 = arith.divf %69, %70 : vector<8x128xf32>
    %72 = vector.extract_strided_slice %65 {offsets = [0, 128], sizes = [8, 128], strides = [1, 1]} : vector<8x512xf32> to vector<8x128xf32>
    %73 = arith.negf %72 : vector<8x128xf32>
    %74 = math.exp %73 : vector<8x128xf32>
    %cst_27 = arith.constant 1.000000e+00 : f32
    %75 = vector.broadcast %cst_27 : f32 to vector<8x128xf32>
    %76 = arith.addf %75, %74 : vector<8x128xf32>
    %77 = arith.divf %75, %76 : vector<8x128xf32>
    %78 = vector.extract_strided_slice %65 {offsets = [0, 256], sizes = [8, 128], strides = [1, 1]} : vector<8x512xf32> to vector<8x128xf32>
    %79 = math.tanh %78 : vector<8x128xf32>
    %80 = vector.extract_strided_slice %65 {offsets = [0, 384], sizes = [8, 128], strides = [1, 1]} : vector<8x512xf32> to vector<8x128xf32>
    %81 = arith.negf %80 : vector<8x128xf32>
    %82 = math.exp %81 : vector<8x128xf32>
    %cst_28 = arith.constant 1.000000e+00 : f32
    %83 = vector.broadcast %cst_28 : f32 to vector<8x128xf32>
    %84 = arith.addf %83, %82 : vector<8x128xf32>
    %85 = arith.divf %83, %84 : vector<8x128xf32>
    %86 = arith.mulf %77, %55 : vector<8x128xf32>
    %87 = arith.mulf %71, %79 : vector<8x128xf32>
    %88 = arith.addf %86, %87 : vector<8x128xf32>
    %89 = math.tanh %88 : vector<8x128xf32>
    %90 = arith.mulf %85, %89 : vector<8x128xf32>
    %91 = arith.addi %6, %c1_i32 : i32
    %c0_i32_29 = arith.constant 0 : i32
    %92 = arith.cmpi eq, %arg0, %c0_i32_29 : i32
    %c7_i32_30 = arith.constant 7 : i32
    %93 = arith.subi %c7_i32_30, %91 : i32
    %94 = arith.select %92, %91, %93 : i32
    %c0_i32_31 = arith.constant 0 : i32
    %95 = arith.cmpi sge, %94, %c0_i32_31 : i32
    %96 = vector.broadcast %94 : i32 to vector<8x1xi32>
    %97 = arith.cmpi slt, %96, %3 : vector<8x1xi32>
    %98 = vector.broadcast %95 : i1 to vector<8x1xi1>
    %99 = arith.andi %98, %97 : vector<8x1xi1>
    %100 = vector.shape_cast %99 : vector<8x1xi1> to vector<8x1xi1>
    %101 = vector.broadcast %100 : vector<8x1xi1> to vector<8x128xi1>
    %102 = arith.select %101, %90, %52 : vector<8x128xi1>, vector<8x128xf32>
    %103 = vector.shape_cast %99 : vector<8x1xi1> to vector<8x1xi1>
    %104 = vector.broadcast %103 : vector<8x1xi1> to vector<8x128xi1>
    %105 = arith.select %104, %88, %55 : vector<8x128xi1>, vector<8x128xf32>
    %cst_32 = arith.constant 0.000000e+00 : f32
    %106 = vector.broadcast %cst_32 : f32 to vector<8x128xf32>
    %107 = vector.shape_cast %99 : vector<8x1xi1> to vector<8x1xi1>
    %108 = vector.broadcast %107 : vector<8x1xi1> to vector<8x128xi1>
    %109 = arith.select %108, %90, %106 : vector<8x128xi1>, vector<8x128xf32>
    %110 = arith.maximumf %60, %109 : vector<8x128xf32>
    %c2_i32 = arith.constant 2 : i32
    %c0_33 = arith.constant 0 : index
    %111 = arith.index_cast %c2_i32 : i32 to index
    %c0_34 = arith.constant 0 : index
    %c0_35 = arith.constant 0 : index
    %112 = vector.load %arg2[%c0_33, %111, %c0_34, %c0_35] : memref<1x4x8x512xf32, #tpu.memory_space<vmem>>, vector<1x1x8x512xf32>
    %113 = vector.shape_cast %112 : vector<1x1x8x512xf32> to vector<8x512xf32>
    %cst_36 = arith.constant dense<0.000000e+00> : vector<8x512xf32>
    %114 = tpu.matmul %102, %5, %cst_36 {dimension_numbers = #tpu.dot_dimension_numbers<[1], [0], [0], [1], [0, 0, 1, 1], [], []>} : vector<8x128xf32>, vector<128x512xf32>, vector<8x512xf32> -> vector<8x512xf32>
    %115 = arith.addf %113, %114 : vector<8x512xf32>
    %116 = vector.extract_strided_slice %115 {offsets = [0, 0], sizes = [8, 128], strides = [1, 1]} : vector<8x512xf32> to vector<8x128xf32>
    %117 = arith.negf %116 : vector<8x128xf32>
    %118 = math.exp %117 : vector<8x128xf32>
    %cst_37 = arith.constant 1.000000e+00 : f32
    %119 = vector.broadcast %cst_37 : f32 to vector<8x128xf32>
    %120 = arith.addf %119, %118 : vector<8x128xf32>
    %121 = arith.divf %119, %120 : vector<8x128xf32>
    %122 = vector.extract_strided_slice %115 {offsets = [0, 128], sizes = [8, 128], strides = [1, 1]} : vector<8x512xf32> to vector<8x128xf32>
    %123 = arith.negf %122 : vector<8x128xf32>
    %124 = math.exp %123 : vector<8x128xf32>
    %cst_38 = arith.constant 1.000000e+00 : f32
    %125 = vector.broadcast %cst_38 : f32 to vector<8x128xf32>
    %126 = arith.addf %125, %124 : vector<8x128xf32>
    %127 = arith.divf %125, %126 : vector<8x128xf32>
    %128 = vector.extract_strided_slice %115 {offsets = [0, 256], sizes = [8, 128], strides = [1, 1]} : vector<8x512xf32> to vector<8x128xf32>
    %129 = math.tanh %128 : vector<8x128xf32>
    %130 = vector.extract_strided_slice %115 {offsets = [0, 384], sizes = [8, 128], strides = [1, 1]} : vector<8x512xf32> to vector<8x128xf32>
    %131 = arith.negf %130 : vector<8x128xf32>
    %132 = math.exp %131 : vector<8x128xf32>
    %cst_39 = arith.constant 1.000000e+00 : f32
    %133 = vector.broadcast %cst_39 : f32 to vector<8x128xf32>
    %134 = arith.addf %133, %132 : vector<8x128xf32>
    %135 = arith.divf %133, %134 : vector<8x128xf32>
    %136 = arith.mulf %127, %105 : vector<8x128xf32>
    %137 = arith.mulf %121, %129 : vector<8x128xf32>
    %138 = arith.addf %136, %137 : vector<8x128xf32>
    %139 = math.tanh %138 : vector<8x128xf32>
    %140 = arith.mulf %135, %139 : vector<8x128xf32>
    %141 = arith.addi %6, %c2_i32 : i32
    %c0_i32_40 = arith.constant 0 : i32
    %142 = arith.cmpi eq, %arg0, %c0_i32_40 : i32
    %c7_i32_41 = arith.constant 7 : i32
    %143 = arith.subi %c7_i32_41, %141 : i32
    %144 = arith.select %142, %141, %143 : i32
    %c0_i32_42 = arith.constant 0 : i32
    %145 = arith.cmpi sge, %144, %c0_i32_42 : i32
    %146 = vector.broadcast %144 : i32 to vector<8x1xi32>
    %147 = arith.cmpi slt, %146, %3 : vector<8x1xi32>
    %148 = vector.broadcast %145 : i1 to vector<8x1xi1>
    %149 = arith.andi %148, %147 : vector<8x1xi1>
    %150 = vector.shape_cast %149 : vector<8x1xi1> to vector<8x1xi1>
    %151 = vector.broadcast %150 : vector<8x1xi1> to vector<8x128xi1>
    %152 = arith.select %151, %140, %102 : vector<8x128xi1>, vector<8x128xf32>
    %153 = vector.shape_cast %149 : vector<8x1xi1> to vector<8x1xi1>
    %154 = vector.broadcast %153 : vector<8x1xi1> to vector<8x128xi1>
    %155 = arith.select %154, %138, %105 : vector<8x128xi1>, vector<8x128xf32>
    %cst_43 = arith.constant 0.000000e+00 : f32
    %156 = vector.broadcast %cst_43 : f32 to vector<8x128xf32>
    %157 = vector.shape_cast %149 : vector<8x1xi1> to vector<8x1xi1>
    %158 = vector.broadcast %157 : vector<8x1xi1> to vector<8x128xi1>
    %159 = arith.select %158, %140, %156 : vector<8x128xi1>, vector<8x128xf32>
    %160 = arith.maximumf %110, %159 : vector<8x128xf32>
    %c3_i32 = arith.constant 3 : i32
    %c0_44 = arith.constant 0 : index
    %161 = arith.index_cast %c3_i32 : i32 to index
    %c0_45 = arith.constant 0 : index
    %c0_46 = arith.constant 0 : index
    %162 = vector.load %arg2[%c0_44, %161, %c0_45, %c0_46] : memref<1x4x8x512xf32, #tpu.memory_space<vmem>>, vector<1x1x8x512xf32>
    %163 = vector.shape_cast %162 : vector<1x1x8x512xf32> to vector<8x512xf32>
    %cst_47 = arith.constant dense<0.000000e+00> : vector<8x512xf32>
    %164 = tpu.matmul %152, %5, %cst_47 {dimension_numbers = #tpu.dot_dimension_numbers<[1], [0], [0], [1], [0, 0, 1, 1], [], []>} : vector<8x128xf32>, vector<128x512xf32>, vector<8x512xf32> -> vector<8x512xf32>
    %165 = arith.addf %163, %164 : vector<8x512xf32>
    %166 = vector.extract_strided_slice %165 {offsets = [0, 0], sizes = [8, 128], strides = [1, 1]} : vector<8x512xf32> to vector<8x128xf32>
    %167 = arith.negf %166 : vector<8x128xf32>
    %168 = math.exp %167 : vector<8x128xf32>
    %cst_48 = arith.constant 1.000000e+00 : f32
    %169 = vector.broadcast %cst_48 : f32 to vector<8x128xf32>
    %170 = arith.addf %169, %168 : vector<8x128xf32>
    %171 = arith.divf %169, %170 : vector<8x128xf32>
    %172 = vector.extract_strided_slice %165 {offsets = [0, 128], sizes = [8, 128], strides = [1, 1]} : vector<8x512xf32> to vector<8x128xf32>
    %173 = arith.negf %172 : vector<8x128xf32>
    %174 = math.exp %173 : vector<8x128xf32>
    %cst_49 = arith.constant 1.000000e+00 : f32
    %175 = vector.broadcast %cst_49 : f32 to vector<8x128xf32>
    %176 = arith.addf %175, %174 : vector<8x128xf32>
    %177 = arith.divf %175, %176 : vector<8x128xf32>
    %178 = vector.extract_strided_slice %165 {offsets = [0, 256], sizes = [8, 128], strides = [1, 1]} : vector<8x512xf32> to vector<8x128xf32>
    %179 = math.tanh %178 : vector<8x128xf32>
    %180 = vector.extract_strided_slice %165 {offsets = [0, 384], sizes = [8, 128], strides = [1, 1]} : vector<8x512xf32> to vector<8x128xf32>
    %181 = arith.negf %180 : vector<8x128xf32>
    %182 = math.exp %181 : vector<8x128xf32>
    %cst_50 = arith.constant 1.000000e+00 : f32
    %183 = vector.broadcast %cst_50 : f32 to vector<8x128xf32>
    %184 = arith.addf %183, %182 : vector<8x128xf32>
    %185 = arith.divf %183, %184 : vector<8x128xf32>
    %186 = arith.mulf %177, %155 : vector<8x128xf32>
    %187 = arith.mulf %171, %179 : vector<8x128xf32>
    %188 = arith.addf %186, %187 : vector<8x128xf32>
    %189 = math.tanh %188 : vector<8x128xf32>
    %190 = arith.mulf %185, %189 : vector<8x128xf32>
    %191 = arith.addi %6, %c3_i32 : i32
    %c0_i32_51 = arith.constant 0 : i32
    %192 = arith.cmpi eq, %arg0, %c0_i32_51 : i32
    %c7_i32_52 = arith.constant 7 : i32
    %193 = arith.subi %c7_i32_52, %191 : i32
    %194 = arith.select %192, %191, %193 : i32
    %c0_i32_53 = arith.constant 0 : i32
    %195 = arith.cmpi sge, %194, %c0_i32_53 : i32
    %196 = vector.broadcast %194 : i32 to vector<8x1xi32>
    %197 = arith.cmpi slt, %196, %3 : vector<8x1xi32>
    %198 = vector.broadcast %195 : i1 to vector<8x1xi1>
    %199 = arith.andi %198, %197 : vector<8x1xi1>
    %200 = vector.shape_cast %199 : vector<8x1xi1> to vector<8x1xi1>
    %201 = vector.broadcast %200 : vector<8x1xi1> to vector<8x128xi1>
    %202 = arith.select %201, %190, %152 : vector<8x128xi1>, vector<8x128xf32>
    %203 = vector.shape_cast %199 : vector<8x1xi1> to vector<8x1xi1>
    %204 = vector.broadcast %203 : vector<8x1xi1> to vector<8x128xi1>
    %205 = arith.select %204, %188, %155 : vector<8x128xi1>, vector<8x128xf32>
    %cst_54 = arith.constant 0.000000e+00 : f32
    %206 = vector.broadcast %cst_54 : f32 to vector<8x128xf32>
    %207 = vector.shape_cast %199 : vector<8x1xi1> to vector<8x1xi1>
    %208 = vector.broadcast %207 : vector<8x1xi1> to vector<8x128xi1>
    %209 = arith.select %208, %190, %206 : vector<8x128xi1>, vector<8x128xf32>
    %210 = arith.maximumf %160, %209 : vector<8x128xf32>
    %c4_i32_55 = arith.constant 4 : i32
    %c0_56 = arith.constant 0 : index
    %c0_57 = arith.constant 0 : index
    %211 = vector.load %arg6[%c0_56, %c0_57] : memref<8x128xf32, #tpu.memory_space<vmem>>, vector<8x128xf32>
    tpu.vector_store %arg6[%c0_56, %c0_57], %202 {strides = array<i32>} : memref<8x128xf32, #tpu.memory_space<vmem>>, vector<8x128xf32>,
    %c0_58 = arith.constant 0 : index
    %c0_59 = arith.constant 0 : index
    %212 = vector.load %arg7[%c0_58, %c0_59] : memref<8x128xf32, #tpu.memory_space<vmem>>, vector<8x128xf32>
    tpu.vector_store %arg7[%c0_58, %c0_59], %205 {strides = array<i32>} : memref<8x128xf32, #tpu.memory_space<vmem>>, vector<8x128xf32>,
    %c0_60 = arith.constant 0 : index
    %c0_61 = arith.constant 0 : index
    %c0_62 = arith.constant 0 : index
    %213 = vector.load %arg5[%c0_60, %c0_61, %c0_62] : memref<1x8x128xf32, #tpu.memory_space<vmem>>, vector<1x8x128xf32>
    %214 = vector.shape_cast %213 : vector<1x8x128xf32> to vector<8x128xf32>
    %215 = vector.shape_cast %210 : vector<8x128xf32> to vector<1x8x128xf32>
    tpu.vector_store %arg5[%c0_60, %c0_61, %c0_62], %215 {strides = array<i32>} : memref<1x8x128xf32, #tpu.memory_space<vmem>>, vector<1x8x128xf32>,
    return
  }
  func.func @transform_0(%arg0: i32, %arg1: i32) -> (i32, i32, i32, i32) {
    %c0_i32 = arith.constant 0 : i32
    %c0_i32_0 = arith.constant 0 : i32
    %c0_i32_1 = arith.constant 0 : i32
    return %arg0, %arg1, %c0_i32, %c0_i32_0 : i32, i32, i32, i32
  }
  func.func @transform_1(%arg0: i32, %arg1: i32) -> (i32, i32, i32) {
    %c0_i32 = arith.constant 0 : i32
    %c0_i32_0 = arith.constant 0 : i32
    %c0_i32_1 = arith.constant 0 : i32
    return %arg0, %c0_i32, %c0_i32_0 : i32, i32, i32
  }
  func.func @transform_2(%arg0: i32, %arg1: i32) -> (i32, i32) {
    %c0_i32 = arith.constant 0 : i32
    %c0_i32_0 = arith.constant 0 : i32
    %c0_i32_1 = arith.constant 0 : i32
    return %c0_i32, %c0_i32_0 : i32, i32
  }
  func.func @transform_3(%arg0: i32, %arg1: i32) -> (i32, i32, i32) {
    %c0_i32 = arith.constant 0 : i32
    %c0_i32_0 = arith.constant 0 : i32
    %c0_i32_1 = arith.constant 0 : i32
    return %arg0, %c0_i32, %c0_i32_0 : i32, i32, i32
  }
}

</mosaic_0001>

<llo_original>
// kernel: tpu_custom_call.1
$region0: #{tpu_custom_call.1}
  #allocation0 [shape = 'u32[]', space=smem, size = 0x4, offset = 0x4, fixed_abs, tag = 'smem constant byte address 0x4 - core index']
  #allocation1 [shape = 'u32[72,128]{1,0:T(1,128)}', space=vmem, size = 0x9000, scoped, tag = 'internal scratch']
  #allocation2 [shape = 'f32[8,128]{1,0:T(8,128)}', space=vmem, size = 0x1000, scoped, tag = 'scratch operand']
  #allocation3 [shape = 'f32[8,128]{1,0:T(8,128)}', space=vmem, size = 0x1000, scoped, tag = 'scratch operand']
  %s0 = inlined_call_operand.hbm [shape: f32[2,8,8,512], index: 0, kind: input, shape index: {}]
  %s1 = inlined_call_operand.hbm [shape: f32[2,128,512], index: 1, kind: input, shape index: {}]
  %s2 = inlined_call_operand.vmem [shape: s32[8,1], index: 2, kind: input, shape index: {}]
  %s3 = inlined_call_operand.hbm [shape: f32[2,8,128], index: 3, kind: output, shape index: {}]
  %s4 = sld [smem:[#allocation0]]
  $region57: #{tpu_custom_call.1} parent=0
    _
  %s6 = ssub.s32 1, %s4
  %s7 = scalar_select 0, %s6, %s4
  $region1: #{tpu_custom_call.1} parent=0
    #allocation4 [shape = 'u8[131072]{0}', space=vmem, size = 0x20000, scoped, tag = 'input window, operand 0']
    #allocation5 [shape = 's32[2]{0}', space=sflag, size = 0x8, scoped, tag = 'scoped memory for tpu_custom_call.1']
    #allocation6 [shape = 's32[2]{0}', space=sflag, size = 0x8, scoped, tag = 'scoped memory for tpu_custom_call.1']
    #allocation7 [shape = 'u8[524288]{0}', space=vmem, size = 0x80000, scoped, tag = 'input window, operand 1']
    #allocation8 [shape = 's32[2]{0}', space=sflag, size = 0x8, scoped, tag = 'scoped memory for tpu_custom_call.1']
    #allocation9 [shape = 'u8[8192]{0}', space=vmem, size = 0x2000, scoped, tag = 'output window, operand 0']
    %8 = vsyncpa [#allocation5], 0
    %s9 = scalar_lea.sflag [#allocation5], 1
    %10 = vsyncpa %s9, 0
    %11 = vsyncpa [#allocation8], 0
    %s12 = scalar_lea.sflag [#allocation8], 1
    %13 = vsyncpa %s12, 0
    %14 = vsyncpa [#allocation6], 0
    %s15 = scalar_lea.sflag [#allocation6], 1
    %16 = vsyncpa %s15, 0
    loop: start=0, step=1, limit=6
    $region2: #{tpu_custom_call.1} parent=1 // loop_pre_header
      _
    $region3: #{tpu_custom_call.1} parent=1 // loop_header
      %s18 = sphi 0, %s22
      %p19 = scmp.ge.s32.totalorder %s18, 6
      %s25 = sphi 0, %s37
      %s26 = sphi 0, %s33
      %s27 = sphi 0, %s25
      %s28 = sphi 0, %s26
      %s29 = sphi 0, %s27
      %s30 = sphi 0, %s28
      %s42 = sphi 0, %s44
      %s45 = sphi 0, %s42
      %s46 = sphi 0, %s45
      %s62 = sphi 0, %s46
      %s68 = sphi 0, %s70
      %s71 = sphi 0, %s68
      %s72 = sphi 0, %s71
      %s88 = sphi 0, %s72
      %s92 = sphi 0, %s92
      %s94 = sphi 0, %s92
      %s95 = sphi 0, %s94
      %s109 = sphi 0, %s95
      %s115 = sphi 0, %s117
      %s118 = sphi 0, %s115
      %s119 = sphi 0, %s118
      %s135 = sphi 0, %s119
    $region4: #{tpu_custom_call.1} parent=1 // loop_header_branch
      %21 = sbr.rel (%p19) target = $region8
    $region5: #{tpu_custom_call.1} parent=1 // loop_body
      %s23 = ssub.s32 %s18, 1
      %s24 = ssub.s32 %s18, 2
      %s31 = sadd.s32 1, %s26
      %p32 = scmp.ge.s32.totalorder %s31, 2
      %s33 = scalar_select %p32, 0, %s31
      %s34 = sadd.s32 1, %s25
      %s35 = scalar_select %p32, %s34, %s25
      %p36 = scmp.ge.s32.totalorder %s35, 2
      %s37 = scalar_select %p36, 0, %s35
      %s38 = ssub.s32 %s25, %s37
      %s39 = ssub.s32 %s26, %s33
      %s40 = sor.u32 %s38, %s39
      %p41 = scmp.eq.s32.totalorder %s40, 0
      %s43 = sadd.s32 %s42, 1
      %s44 = scalar_select %p41, %s42, %s43
      %p47 = pneg %p41
      %p48 = scmp.eq.s32.totalorder %s18, 3
      %p49 = por %p47, %p48
      %p50 = scmp.ne.s32.totalorder %s42, %s45
      %p51 = scmp.eq.s32.totalorder %s18, 0
      %p52 = por %p50, %p51
      %p53 = scmp.ne.s32.totalorder %s42, %s45
      %p54 = scmp.eq.s32.totalorder %s23, 3
      %p55 = por %p53, %p54
      %p56 = scmp.ne.s32.totalorder %s45, %s46
      %p57 = scmp.eq.s32.totalorder %s23, 0
      %p58 = por %p56, %p57
      %p59 = scmp.ne.s32.totalorder %s45, %s46
      %p60 = scmp.eq.s32.totalorder %s24, 3
      %p61 = por %p59, %p60
      %p63 = scmp.ne.s32.totalorder %s46, %s62
      %p64 = scmp.eq.s32.totalorder %s24, 0
      %p65 = por %p63, %p64
      %s66 = ssub.s32 %s25, %s37
      %p67 = scmp.eq.s32.totalorder %s66, 0
      %s69 = sadd.s32 %s68, 1
      %s70 = scalar_select %p67, %s68, %s69
      %p73 = pneg %p67
      %p74 = scmp.eq.s32.totalorder %s18, 3
      %p75 = por %p73, %p74
      %p76 = scmp.ne.s32.totalorder %s68, %s71
      %p77 = scmp.eq.s32.totalorder %s18, 0
      %p78 = por %p76, %p77
      %p79 = scmp.ne.s32.totalorder %s68, %s71
      %p80 = scmp.eq.s32.totalorder %s23, 3
      %p81 = por %p79, %p80
      %p82 = scmp.ne.s32.totalorder %s71, %s72
      %p83 = scmp.eq.s32.totalorder %s23, 0
      %p84 = por %p82, %p83
      %p85 = scmp.ne.s32.totalorder %s71, %s72
      %p86 = scmp.eq.s32.totalorder %s24, 3
      %p87 = por %p85, %p86
      %p89 = scmp.ne.s32.totalorder %s72, %s88
      %p90 = scmp.eq.s32.totalorder %s24, 0
      %p91 = por %p89, %p90
      %s93 = sadd.s32 %s92, 1
      %p96 = scmp.eq.s32.totalorder %s18, 3
      %p97 = scmp.ne.s32.totalorder %s92, %s94
      %p98 = scmp.eq.s32.totalorder %s18, 0
      %p99 = por %p97, %p98
      %p100 = scmp.ne.s32.totalorder %s92, %s94
      %p101 = scmp.eq.s32.totalorder %s23, 3
      %p102 = por %p100, %p101
      %p103 = scmp.ne.s32.totalorder %s94, %s95
      %p104 = scmp.eq.s32.totalorder %s23, 0
      %p105 = por %p103, %p104
      %p106 = scmp.ne.s32.totalorder %s94, %s95
      %p107 = scmp.eq.s32.totalorder %s24, 3
      %p108 = por %p106, %p107
      %p110 = scmp.ne.s32.totalorder %s95, %s109
      %p111 = scmp.eq.s32.totalorder %s24, 0
      %p112 = por %p110, %p111
      %s113 = ssub.s32 %s25, %s37
      %p114 = scmp.eq.s32.totalorder %s113, 0
      %s116 = sadd.s32 %s115, 1
      %s117 = scalar_select %p114, %s115, %s116
      %p120 = pneg %p114
      %p121 = scmp.eq.s32.totalorder %s18, 3
      %p122 = por %p120, %p121
      %p123 = scmp.ne.s32.totalorder %s115, %s118
      %p124 = scmp.eq.s32.totalorder %s18, 0
      %p125 = por %p123, %p124
      %p126 = scmp.ne.s32.totalorder %s115, %s118
      %p127 = scmp.eq.s32.totalorder %s23, 3
      %p128 = por %p126, %p127
      %p129 = scmp.ne.s32.totalorder %s118, %s119
      %p130 = scmp.eq.s32.totalorder %s23, 0
      %p131 = por %p129, %p130
      %p132 = scmp.ne.s32.totalorder %s118, %s119
      %p133 = scmp.eq.s32.totalorder %s24, 3
      %p134 = por %p132, %p133
      %p136 = scmp.ne.s32.totalorder %s119, %s135
      %p137 = scmp.eq.s32.totalorder %s24, 0
      %p138 = por %p136, %p137
      %p139 = scmp.le.s32.totalorder 1, %s18
      %p140 = scmp.lt.s32.totalorder %s18, 5
      %p141 = pnand %p139, %p140
      %p142 = pneg %p141
      // Predicated region
      $region9: #{tpu_custom_call.1} parent=5 // pred_check
        _
      $region10: #{tpu_custom_call.1} parent=5 // pred_check_branch
        %144 = sbr.rel (%p141) target = $region12
      $region11: #{tpu_custom_call.1} parent=5 // pred_region
        %s145 = ssub.s32 %s18, 1
        // Predicated region
        $region13: #{tpu_custom_call.1} parent=11 // pred_check
          %p146 = pneg %p105
        $region14: #{tpu_custom_call.1} parent=11 // pred_check_branch
          %148 = sbr.rel (%p146) target = $region16
        $region15: #{tpu_custom_call.1} parent=11 // pred_region
          _
        $region16: #{tpu_custom_call.1} parent=11 // pred_fallthru
          _
      $region12: #{tpu_custom_call.1} parent=5 // pred_fallthru
        _
      %p149 = scmp.lt.s32.totalorder %s18, 4
      // Predicated region
      $region17: #{tpu_custom_call.1} parent=5 // pred_check
        %p150 = pneg %p149
      $region18: #{tpu_custom_call.1} parent=5 // pred_check_branch
        %152 = sbr.rel (%p150) target = $region20
      $region19: #{tpu_custom_call.1} parent=5 // pred_region
        // Predicated region
        $region21: #{tpu_custom_call.1} parent=19 // pred_check
          %p153 = pneg %p52
        $region22: #{tpu_custom_call.1} parent=19 // pred_check_branch
          %155 = sbr.rel (%p153) target = $region24
        $region23: #{tpu_custom_call.1} parent=19 // pred_region
          %s156 = sand.u32 %s42, 1
          %s157 = scalar_lea.sflag [#allocation5], %s156
          %s158 = sand.u32 %s42, 1
          %s159 = smul.addr %s158, 128
          %s160 = scalar_lea.vmem [#allocation4], %s159
          %s161 = smul.u32 4, %s26
          %163 = vsyncadd %s157, 0
          %s164 = smul.addr %s161, 4
          %s165 = smul.addr %s25, 32
          %s166 = sadd.s32 %s164, %s165
          %s167 = smul.addr %s166, 8
          %s168 = scalar_lea.hbm %s0, %s167
          %s169 = sshll.u32 %s168, 4
          %s170 = int_to_ptr.hbm [resolvable:$true] %s169
          %s171 = sshll.u32 %s160, 4
          %s172 = int_to_ptr.vmem [resolvable:$true] %s171
          %177 = dma.hbm_to_vmem [thread:$0]  %s170, 2048, %s172, %s157, 512, 512, 32
        $region24: #{tpu_custom_call.1} parent=19 // pred_fallthru
          _
        // Predicated region
        $region25: #{tpu_custom_call.1} parent=19 // pred_check
          %p178 = pneg %p78
        $region26: #{tpu_custom_call.1} parent=19 // pred_check_branch
          %180 = sbr.rel (%p178) target = $region28
        $region27: #{tpu_custom_call.1} parent=19 // pred_region
          %s181 = sand.u32 %s68, 1
          %s182 = scalar_lea.sflag [#allocation8], %s181
          %s183 = sand.u32 %s68, 1
          %s184 = smul.addr %s183, 512
          %s185 = scalar_lea.vmem [#allocation7], %s184
          %187 = vsyncadd %s182, 0
          %s188 = smul.addr %s25, 64
          %s189 = smul.addr %s188, 8
          %s190 = scalar_lea.hbm %s1, %s189
          %s191 = sshll.u32 %s190, 4
          %s192 = int_to_ptr.hbm [resolvable:$true] %s191
          %s193 = sshll.u32 %s185, 4
          %s194 = int_to_ptr.vmem [resolvable:$true] %s193
          %199 = dma.hbm_to_vmem [thread:$0]  %s192, 8192, %s194, %s182, 512, 512, 32
        $region28: #{tpu_custom_call.1} parent=19 // pred_fallthru
          _
      $region20: #{tpu_custom_call.1} parent=5 // pred_fallthru
        _
      %p200 = scmp.le.s32.totalorder 1, %s18
      %p201 = scmp.lt.s32.totalorder %s18, 5
      %p202 = pnand %p200, %p201
      %p203 = pneg %p202
      // Predicated region
      $region29: #{tpu_custom_call.1} parent=5 // pred_check
        _
      $region30: #{tpu_custom_call.1} parent=5 // pred_check_branch
        %205 = sbr.rel (%p202) target = $region32
      $region31: #{tpu_custom_call.1} parent=5 // pred_region
        %s206 = ssub.s32 %s18, 1
        %s207 = sand.u32 %s45, 1
        %s208 = scalar_lea.sflag [#allocation5], %s207
        %s209 = sand.u32 %s45, 1
        %s210 = smul.addr %s209, 128
        %s211 = scalar_lea.vmem [#allocation4], %s210
        // Predicated region
        $region33: #{tpu_custom_call.1} parent=31 // pred_check
          %p212 = pneg %p58
        $region34: #{tpu_custom_call.1} parent=31 // pred_check_branch
          %214 = sbr.rel (%p212) target = $region36
        $region35: #{tpu_custom_call.1} parent=31 // pred_region
          %216 = dma.done %s208, 2048
        $region36: #{tpu_custom_call.1} parent=31 // pred_fallthru
          _
        %s217 = sand.u32 %s71, 1
        %s218 = scalar_lea.sflag [#allocation8], %s217
        %s219 = sand.u32 %s71, 1
        %s220 = smul.addr %s219, 512
        %s221 = scalar_lea.vmem [#allocation7], %s220
        // Predicated region
        $region37: #{tpu_custom_call.1} parent=31 // pred_check
          %p222 = pneg %p84
        $region38: #{tpu_custom_call.1} parent=31 // pred_check_branch
          %224 = sbr.rel (%p222) target = $region40
        $region39: #{tpu_custom_call.1} parent=31 // pred_region
          %226 = dma.done %s218, 8192
        $region40: #{tpu_custom_call.1} parent=31 // pred_fallthru
          _
        %s227 = sand.u32 %s45, 1
        %s228 = scalar_lea.sflag [#allocation5], %s227
        %s229 = sand.u32 %s45, 1
        %s230 = smul.addr %s229, 128
        %s231 = scalar_lea.vmem [#allocation4], %s230
        %p232 = pneg %p58
        %p233 = pneg %p55
        %s234 = sand.u32 %s71, 1
        %s235 = scalar_lea.sflag [#allocation8], %s234
        %s236 = sand.u32 %s71, 1
        %s237 = smul.addr %s236, 512
        %s238 = scalar_lea.vmem [#allocation7], %s237
        %p239 = pneg %p84
        %p240 = pneg %p81
        %p241 = pneg %p105
        %p242 = pneg %p102
        %p243 = pneg %p131
        %p244 = pneg %p128
        %s245 = sand.u32 %s118, 1
        %s246 = scalar_lea.sflag [#allocation6], %s245
        %s247 = sand.u32 %s118, 1
        %s248 = smul.addr %s247, 8
        %s249 = scalar_lea.vmem [#allocation9], %s248
        %s250 = smul.u32 4, %s28
        %p251 = scmp.eq.s32.totalorder %s28, 0
        // Predicated region
        $region41: #{tpu_custom_call.1} parent=31 // pred_check
          %p252 = pneg %p251
        $region42: #{tpu_custom_call.1} parent=31 // pred_check_branch
          %254 = sbr.rel (%p252) target = $region44
        $region43: #{tpu_custom_call.1} parent=31 // pred_region
          %255 = vst [vmem:[#allocation2] sm:$0xff] 0.0
          %256 = vst [vmem:[#allocation3] sm:$0xff] 0.0
          %257 = vst [vmem:[%s249] sm:$0xff] -inf
        $region44: #{tpu_custom_call.1} parent=31 // pred_fallthru
          _
        %v258 = vld [vmem:[%s2] sm:$0xff]
        %v259 = vld [vmem:[%s221] sm:$0xff]
        %v260 = vld [vmem:[%s221 + $0x8] sm:$0xff]
        %v261 = vld [vmem:[%s221 + $0x10] sm:$0xff]
        %v262 = vld [vmem:[%s221 + $0x18] sm:$0xff]
        %v263 = vld [vmem:[%s221 + $0x20] sm:$0xff]
        %v264 = vld [vmem:[%s221 + $0x28] sm:$0xff]
        %v265 = vld [vmem:[%s221 + $0x30] sm:$0xff]
        %v266 = vld [vmem:[%s221 + $0x38] sm:$0xff]
        %v267 = vld [vmem:[%s221 + $0x40] sm:$0xff]
        %v268 = vld [vmem:[%s221 + $0x48] sm:$0xff]
        %v269 = vld [vmem:[%s221 + $0x50] sm:$0xff]
        %v270 = vld [vmem:[%s221 + $0x58] sm:$0xff]
        %v271 = vld [vmem:[%s221 + $0x60] sm:$0xff]
        %v272 = vld [vmem:[%s221 + $0x68] sm:$0xff]
        %v273 = vld [vmem:[%s221 + $0x70] sm:$0xff]
        %v274 = vld [vmem:[%s221 + $0x78] sm:$0xff]
        %v275 = vld [vmem:[%s221 + $0x80] sm:$0xff]
        %v276 = vld [vmem:[%s221 + $0x88] sm:$0xff]
        %v277 = vld [vmem:[%s221 + $0x90] sm:$0xff]
        %v278 = vld [vmem:[%s221 + $0x98] sm:$0xff]
        %v279 = vld [vmem:[%s221 + $0xa0] sm:$0xff]
        %v280 = vld [vmem:[%s221 + $0xa8] sm:$0xff]
        %v281 = vld [vmem:[%s221 + $0xb0] sm:$0xff]
        %v282 = vld [vmem:[%s221 + $0xb8] sm:$0xff]
        %v283 = vld [vmem:[%s221 + $0xc0] sm:$0xff]
        %v284 = vld [vmem:[%s221 + $0xc8] sm:$0xff]
        %v285 = vld [vmem:[%s221 + $0xd0] sm:$0xff]
        %v286 = vld [vmem:[%s221 + $0xd8] sm:$0xff]
        %v287 = vld [vmem:[%s221 + $0xe0] sm:$0xff]
        %v288 = vld [vmem:[%s221 + $0xe8] sm:$0xff]
        %v289 = vld [vmem:[%s221 + $0xf0] sm:$0xff]
        %v290 = vld [vmem:[%s221 + $0xf8] sm:$0xff]
        %v291 = vld [vmem:[%s221 + $0x100] sm:$0xff]
        %v292 = vld [vmem:[%s221 + $0x108] sm:$0xff]
        %v293 = vld [vmem:[%s221 + $0x110] sm:$0xff]
        %v294 = vld [vmem:[%s221 + $0x118] sm:$0xff]
        %v295 = vld [vmem:[%s221 + $0x120] sm:$0xff]
        %v296 = vld [vmem:[%s221 + $0x128] sm:$0xff]
        %v297 = vld [vmem:[%s221 + $0x130] sm:$0xff]
        %v298 = vld [vmem:[%s221 + $0x138] sm:$0xff]
        %v299 = vld [vmem:[%s221 + $0x140] sm:$0xff]
        %v300 = vld [vmem:[%s221 + $0x148] sm:$0xff]
        %v301 = vld [vmem:[%s221 + $0x150] sm:$0xff]
        %v302 = vld [vmem:[%s221 + $0x158] sm:$0xff]
        %v303 = vld [vmem:[%s221 + $0x160] sm:$0xff]
        %v304 = vld [vmem:[%s221 + $0x168] sm:$0xff]
        %v305 = vld [vmem:[%s221 + $0x170] sm:$0xff]
        %v306 = vld [vmem:[%s221 + $0x178] sm:$0xff]
        %v307 = vld [vmem:[%s221 + $0x180] sm:$0xff]
        %v308 = vld [vmem:[%s221 + $0x188] sm:$0xff]
        %v309 = vld [vmem:[%s221 + $0x190] sm:$0xff]
        %v310 = vld [vmem:[%s221 + $0x198] sm:$0xff]
        %v311 = vld [vmem:[%s221 + $0x1a0] sm:$0xff]
        %v312 = vld [vmem:[%s221 + $0x1a8] sm:$0xff]
        %v313 = vld [vmem:[%s221 + $0x1b0] sm:$0xff]
        %v314 = vld [vmem:[%s221 + $0x1b8] sm:$0xff]
        %v315 = vld [vmem:[%s221 + $0x1c0] sm:$0xff]
        %v316 = vld [vmem:[%s221 + $0x1c8] sm:$0xff]
        %v317 = vld [vmem:[%s221 + $0x1d0] sm:$0xff]
        %v318 = vld [vmem:[%s221 + $0x1d8] sm:$0xff]
        %v319 = vld [vmem:[%s221 + $0x1e0] sm:$0xff]
        %v320 = vld [vmem:[%s221 + $0x1e8] sm:$0xff]
        %v321 = vld [vmem:[%s221 + $0x1f0] sm:$0xff]
        %v322 = vld [vmem:[%s221 + $0x1f8] sm:$0xff]
        %s323 = smul.u32 %s28, 4
        %v324 = vld [vmem:[#allocation2] sm:$0xff]
        %v325 = vld [vmem:[#allocation3] sm:$0xff]
        %v326 = vld [vmem:[%s249] sm:$0xff]
        %v327 = vld [vmem:[%s211] sm:$0xff]
        %v328 = vld [vmem:[%s211 + $0x8] sm:$0xff]
        %v329 = vld [vmem:[%s211 + $0x10] sm:$0xff]
        %v330 = vld [vmem:[%s211 + $0x18] sm:$0xff]
        %331 = vmatpush.msra.mxu0 %v319
        %332 = vmatpush.msra.mxu0 %v315
        %333 = vmatpush.msra.mxu0 %v311
        %334 = vmatpush.msra.mxu0 %v307
        %335 = vmatpush.msra.mxu0 %v303
        %336 = vmatpush.msra.mxu0 %v299
        %337 = vmatpush.msra.mxu0 %v295
        %338 = vmatpush.msra.mxu0 %v291
        %339 = vmatpush.msra.mxu0 %v287
        %340 = vmatpush.msra.mxu0 %v283
        %341 = vmatpush.msra.mxu0 %v279
        %342 = vmatpush.msra.mxu0 %v275
        %343 = vmatpush.msra.mxu0 %v271
        %344 = vmatpush.msra.mxu0 %v267
        %345 = vmatpush.msra.mxu0 %v263
        %346 = vmatpush.msra.mxu0 %v259
        %347 = vmatmul.f32.gmra.mxu0 %v324
        %v348 = vpop.f32.mrf.mxu0
        %v349 = vadd.f32 0.0, %v348
        %350 = vdwg.mxu0
        %351 = vmatpush.msra.mxu0 %v320
        %352 = vmatpush.msra.mxu0 %v316
        %353 = vmatpush.msra.mxu0 %v312
        %354 = vmatpush.msra.mxu0 %v308
        %355 = vmatpush.msra.mxu0 %v304
        %356 = vmatpush.msra.mxu0 %v300
        %357 = vmatpush.msra.mxu0 %v296
        %358 = vmatpush.msra.mxu0 %v292
        %359 = vmatpush.msra.mxu0 %v288
        %360 = vmatpush.msra.mxu0 %v284
        %361 = vmatpush.msra.mxu0 %v280
        %362 = vmatpush.msra.mxu0 %v276
        %363 = vmatpush.msra.mxu0 %v272
        %364 = vmatpush.msra.mxu0 %v268
        %365 = vmatpush.msra.mxu0 %v264
        %366 = vmatpush.msra.mxu0 %v260
        %367 = vmatmul.f32.gmra.mxu0 %v324
        %v368 = vpop.f32.mrf.mxu0
        %v369 = vadd.f32 0.0, %v368
        %370 = vdwg.mxu0
        %371 = vmatpush.msra.mxu0 %v321
        %372 = vmatpush.msra.mxu0 %v317
        %373 = vmatpush.msra.mxu0 %v313
        %374 = vmatpush.msra.mxu0 %v309
        %375 = vmatpush.msra.mxu0 %v305
        %376 = vmatpush.msra.mxu0 %v301
        %377 = vmatpush.msra.mxu0 %v297
        %378 = vmatpush.msra.mxu0 %v293
        %379 = vmatpush.msra.mxu0 %v289
        %380 = vmatpush.msra.mxu0 %v285
        %381 = vmatpush.msra.mxu0 %v281
        %382 = vmatpush.msra.mxu0 %v277
        %383 = vmatpush.msra.mxu0 %v273
        %384 = vmatpush.msra.mxu0 %v269
        %385 = vmatpush.msra.mxu0 %v265
        %386 = vmatpush.msra.mxu0 %v261
        %387 = vmatmul.f32.gmra.mxu0 %v324
        %v388 = vpop.f32.mrf.mxu0
        %v389 = vadd.f32 0.0, %v388
        %390 = vdwg.mxu0
        %391 = vmatpush.msra.mxu0 %v322
        %392 = vmatpush.msra.mxu0 %v318
        %393 = vmatpush.msra.mxu0 %v314
        %394 = vmatpush.msra.mxu0 %v310
        %395 = vmatpush.msra.mxu0 %v306
        %396 = vmatpush.msra.mxu0 %v302
        %397 = vmatpush.msra.mxu0 %v298
        %398 = vmatpush.msra.mxu0 %v294
        %399 = vmatpush.msra.mxu0 %v290
        %400 = vmatpush.msra.mxu0 %v286
        %401 = vmatpush.msra.mxu0 %v282
        %402 = vmatpush.msra.mxu0 %v278
        %403 = vmatpush.msra.mxu0 %v274
        %404 = vmatpush.msra.mxu0 %v270
        %405 = vmatpush.msra.mxu0 %v266
        %406 = vmatpush.msra.mxu0 %v262
        %407 = vmatmul.f32.gmra.mxu0 %v324
        %v408 = vpop.f32.mrf.mxu0
        %v409 = vadd.f32 0.0, %v408
        %410 = vdwg.mxu0
        %v411 = vadd.f32 %v327, %v349
        %v412 = vadd.f32 %v328, %v369
        %v413 = vadd.f32 %v329, %v389
        %v414 = vadd.f32 %v330, %v409
        %v415 = vxor.u32 %v411, 2147483648
        %v416 = vmul.f32 %v415, 1.442695
        %v417 = vpow.pop %v416
        %v418 = vadd.f32 %v417, 1.0
        %v419 = vrcp.pop %v418
        %v420 = vmul.f32 %v418, %v419
        %v421 = vsub.f32 1.0, %v420
        %v422 = vmul.f32 %v419, %v421
        %v423 = vadd.f32 %v419, %v422
        %vm424 = vweird.f32 %v418
        %vm425 = vweird.f32 %v419
        %vm426 = vmor %vm424, %vm425
        %v427 = vsel %vm426, %v419, %v423
        %v428 = vand.u32 2147483647, %v418
        %vm429 = vcmp.eq.f32.partialorder %v428, 8.507059e+37
        %v430 = vand.u32 %v418, 2147483648
        %v431 = vor.u32 1.1754944e-38, %v430
        %v432 = vsel %vm429, %v431, %v427
        %v433 = vmul.f32 1.0, %v432
        %v434 = vxor.u32 %v412, 2147483648
        %v435 = vmul.f32 %v434, 1.442695
        %v436 = vpow.pop %v435
        %v437 = vadd.f32 %v436, 1.0
        %v438 = vrcp.pop %v437
        %v439 = vmul.f32 %v437, %v438
        %v440 = vsub.f32 1.0, %v439
        %v441 = vmul.f32 %v438, %v440
        %v442 = vadd.f32 %v438, %v441
        %vm443 = vweird.f32 %v437
        %vm444 = vweird.f32 %v438
        %vm445 = vmor %vm443, %vm444
        %v446 = vsel %vm445, %v438, %v442
        %v447 = vand.u32 2147483647, %v437
        %vm448 = vcmp.eq.f32.partialorder %v447, 8.507059e+37
        %v449 = vand.u32 %v437, 2147483648
        %v450 = vor.u32 1.1754944e-38, %v449
        %v451 = vsel %vm448, %v450, %v446
        %v452 = vmul.f32 1.0, %v451
        %v453 = vtanh.pop %v413
        %v454 = vxor.u32 %v414, 2147483648
        %v455 = vmul.f32 %v454, 1.442695
        %v456 = vpow.pop %v455
        %v457 = vadd.f32 %v456, 1.0
        %v458 = vrcp.pop %v457
        %v459 = vmul.f32 %v457, %v458
        %v460 = vsub.f32 1.0, %v459
        %v461 = vmul.f32 %v458, %v460
        %v462 = vadd.f32 %v458, %v461
        %vm463 = vweird.f32 %v457
        %vm464 = vweird.f32 %v458
        %vm465 = vmor %vm463, %vm464
        %v466 = vsel %vm465, %v458, %v462
        %v467 = vand.u32 2147483647, %v457
        %vm468 = vcmp.eq.f32.partialorder %v467, 8.507059e+37
        %v469 = vand.u32 %v457, 2147483648
        %v470 = vor.u32 1.1754944e-38, %v469
        %v471 = vsel %vm468, %v470, %v466
        %v472 = vmul.f32 1.0, %v471
        %v473 = vmul.f32 %v452, %v325
        %v474 = vmul.f32 %v433, %v453
        %v475 = vadd.f32 %v473, %v474
        %v476 = vtanh.pop %v475
        %v477 = vmul.f32 %v472, %v476
        %p478 = scmp.eq.s32.totalorder %s27, 0
        %s479 = ssub.s32 7, %s323
        %s480 = scalar_select %p478, %s323, %s479
        %p481 = scmp.ge.s32.totalorder %s480, 0
        %v482 = vstv %s480
        %vm483 = vcmp.lt.s32.totalorder %v482, %v258
        %s484 = scalar_select %p481, 1, 0
        %v485 = vstv %s484
        %vm486 = vcmp.eq.s32.totalorder %v485, 1
        %vm487 = vmand %vm486, %vm483
        %v488 = vsel %vm487, 1, 0
        %489 = vset.pattern.permute.xlu0 0
        %490 = vperm.xlu0 %489, %v488
        %v491 = vpop.permute.xlu0 %490
        %vm492 = vcmp.eq.s32.totalorder %v491, 1
        %v493 = vsel %vm492, %v477, %v324
        %v494 = vsel %vm492, %v475, %v325
        %v495 = vsel %vm492, %v477, 0.0
        %v496 = vmax.f32 %v326, %v495
        %s497 = scalar_lea.vmem %s211, 32 [#allocation4]
        %v498 = vld [vmem:[%s497] sm:$0xff]
        %v499 = vld [vmem:[%s497 + $0x8] sm:$0xff]
        %v500 = vld [vmem:[%s497 + $0x10] sm:$0xff]
        %v501 = vld [vmem:[%s497 + $0x18] sm:$0xff]
        %502 = vmatpush.msra.mxu0 %v319
        %503 = vmatpush.msra.mxu0 %v315
        %504 = vmatpush.msra.mxu0 %v311
        %505 = vmatpush.msra.mxu0 %v307
        %506 = vmatpush.msra.mxu0 %v303
        %507 = vmatpush.msra.mxu0 %v299
        %508 = vmatpush.msra.mxu0 %v295
        %509 = vmatpush.msra.mxu0 %v291
        %510 = vmatpush.msra.mxu0 %v287
        %511 = vmatpush.msra.mxu0 %v283
        %512 = vmatpush.msra.mxu0 %v279
        %513 = vmatpush.msra.mxu0 %v275
        %514 = vmatpush.msra.mxu0 %v271
        %515 = vmatpush.msra.mxu0 %v267
        %516 = vmatpush.msra.mxu0 %v263
        %517 = vmatpush.msra.mxu0 %v259
        %518 = vmatmul.f32.gmra.mxu0 %v493
        %v519 = vpop.f32.mrf.mxu0
        %v520 = vadd.f32 0.0, %v519
        %521 = vdwg.mxu0
        %522 = vmatpush.msra.mxu0 %v320
        %523 = vmatpush.msra.mxu0 %v316
        %524 = vmatpush.msra.mxu0 %v312
        %525 = vmatpush.msra.mxu0 %v308
        %526 = vmatpush.msra.mxu0 %v304
        %527 = vmatpush.msra.mxu0 %v300
        %528 = vmatpush.msra.mxu0 %v296
        %529 = vmatpush.msra.mxu0 %v292
        %530 = vmatpush.msra.mxu0 %v288
        %531 = vmatpush.msra.mxu0 %v284
        %532 = vmatpush.msra.mxu0 %v280
        %533 = vmatpush.msra.mxu0 %v276
        %534 = vmatpush.msra.mxu0 %v272
        %535 = vmatpush.msra.mxu0 %v268
        %536 = vmatpush.msra.mxu0 %v264
        %537 = vmatpush.msra.mxu0 %v260
        %538 = vmatmul.f32.gmra.mxu0 %v493
        %v539 = vpop.f32.mrf.mxu0
        %v540 = vadd.f32 0.0, %v539
        %541 = vdwg.mxu0
        %542 = vmatpush.msra.mxu0 %v321
        %543 = vmatpush.msra.mxu0 %v317
        %544 = vmatpush.msra.mxu0 %v313
        %545 = vmatpush.msra.mxu0 %v309
        %546 = vmatpush.msra.mxu0 %v305
        %547 = vmatpush.msra.mxu0 %v301
        %548 = vmatpush.msra.mxu0 %v297
        %549 = vmatpush.msra.mxu0 %v293
        %550 = vmatpush.msra.mxu0 %v289
        %551 = vmatpush.msra.mxu0 %v285
        %552 = vmatpush.msra.mxu0 %v281
        %553 = vmatpush.msra.mxu0 %v277
        %554 = vmatpush.msra.mxu0 %v273
        %555 = vmatpush.msra.mxu0 %v269
        %556 = vmatpush.msra.mxu0 %v265
        %557 = vmatpush.msra.mxu0 %v261
        %558 = vmatmul.f32.gmra.mxu0 %v493
        %v559 = vpop.f32.mrf.mxu0
        %v560 = vadd.f32 0.0, %v559
        %561 = vdwg.mxu0
        %562 = vmatpush.msra.mxu0 %v322
        %563 = vmatpush.msra.mxu0 %v318
        %564 = vmatpush.msra.mxu0 %v314
        %565 = vmatpush.msra.mxu0 %v310
        %566 = vmatpush.msra.mxu0 %v306
        %567 = vmatpush.msra.mxu0 %v302
        %568 = vmatpush.msra.mxu0 %v298
        %569 = vmatpush.msra.mxu0 %v294
        %570 = vmatpush.msra.mxu0 %v290
        %571 = vmatpush.msra.mxu0 %v286
        %572 = vmatpush.msra.mxu0 %v282
        %573 = vmatpush.msra.mxu0 %v278
        %574 = vmatpush.msra.mxu0 %v274
        %575 = vmatpush.msra.mxu0 %v270
        %576 = vmatpush.msra.mxu0 %v266
        %577 = vmatpush.msra.mxu0 %v262
        %578 = vmatmul.f32.gmra.mxu0 %v493
        %v579 = vpop.f32.mrf.mxu0
        %v580 = vadd.f32 0.0, %v579
        %581 = vdwg.mxu0
        %v582 = vadd.f32 %v498, %v520
        %v583 = vadd.f32 %v499, %v540
        %v584 = vadd.f32 %v500, %v560
        %v585 = vadd.f32 %v501, %v580
        %v586 = vxor.u32 %v582, 2147483648
        %v587 = vmul.f32 %v586, 1.442695
        %v588 = vpow.pop %v587
        %v589 = vadd.f32 %v588, 1.0
        %v590 = vrcp.pop %v589
        %v591 = vmul.f32 %v589, %v590
        %v592 = vsub.f32 1.0, %v591
        %v593 = vmul.f32 %v590, %v592
        %v594 = vadd.f32 %v590, %v593
        %vm595 = vweird.f32 %v589
        %vm596 = vweird.f32 %v590
        %vm597 = vmor %vm595, %vm596
        %v598 = vsel %vm597, %v590, %v594
        %v599 = vand.u32 2147483647, %v589
        %vm600 = vcmp.eq.f32.partialorder %v599, 8.507059e+37
        %v601 = vand.u32 %v589, 2147483648
        %v602 = vor.u32 1.1754944e-38, %v601
        %v603 = vsel %vm600, %v602, %v598
        %v604 = vmul.f32 1.0, %v603
        %v605 = vxor.u32 %v583, 2147483648
        %v606 = vmul.f32 %v605, 1.442695
        %v607 = vpow.pop %v606
        %v608 = vadd.f32 %v607, 1.0
        %v609 = vrcp.pop %v608
        %v610 = vmul.f32 %v608, %v609
        %v611 = vsub.f32 1.0, %v610
        %v612 = vmul.f32 %v609, %v611
        %v613 = vadd.f32 %v609, %v612
        %vm614 = vweird.f32 %v608
        %vm615 = vweird.f32 %v609
        %vm616 = vmor %vm614, %vm615
        %v617 = vsel %vm616, %v609, %v613
        %v618 = vand.u32 2147483647, %v608
        %vm619 = vcmp.eq.f32.partialorder %v618, 8.507059e+37
        %v620 = vand.u32 %v608, 2147483648
        %v621 = vor.u32 1.1754944e-38, %v620
        %v622 = vsel %vm619, %v621, %v617
        %v623 = vmul.f32 1.0, %v622
        %v624 = vtanh.pop %v584
        %v625 = vxor.u32 %v585, 2147483648
        %v626 = vmul.f32 %v625, 1.442695
        %v627 = vpow.pop %v626
        %v628 = vadd.f32 %v627, 1.0
        %v629 = vrcp.pop %v628
        %v630 = vmul.f32 %v628, %v629
        %v631 = vsub.f32 1.0, %v630
        %v632 = vmul.f32 %v629, %v631
        %v633 = vadd.f32 %v629, %v632
        %vm634 = vweird.f32 %v628
        %vm635 = vweird.f32 %v629
        %vm636 = vmor %vm634, %vm635
        %v637 = vsel %vm636, %v629, %v633
        %v638 = vand.u32 2147483647, %v628
        %vm639 = vcmp.eq.f32.partialorder %v638, 8.507059e+37
        %v640 = vand.u32 %v628, 2147483648
        %v641 = vor.u32 1.1754944e-38, %v640
        %v642 = vsel %vm639, %v641, %v637
        %v643 = vmul.f32 1.0, %v642
        %v644 = vmul.f32 %v623, %v494
        %v645 = vmul.f32 %v604, %v624
        %v646 = vadd.f32 %v644, %v645
        %v647 = vtanh.pop %v646
        %v648 = vmul.f32 %v643, %v647
        %s649 = sadd.s32 %s323, 1
        %s650 = ssub.s32 6, %s323
        %s651 = scalar_select %p478, %s649, %s650
        %p652 = scmp.ge.s32.totalorder %s651, 0
        %v653 = vstv %s651
        %vm654 = vcmp.lt.s32.totalorder %v653, %v258
        %s655 = scalar_select %p652, 1, 0
        %v656 = vstv %s655
        %vm657 = vcmp.eq.s32.totalorder %v656, 1
        %vm658 = vmand %vm657, %vm654
        %v659 = vsel %vm658, 1, 0
        %660 = vset.pattern.permute.xlu0 0
        %661 = vperm.xlu0 %660, %v659
        %v662 = vpop.permute.xlu0 %661
        %vm663 = vcmp.eq.s32.totalorder %v662, 1
        %v664 = vsel %vm663, %v648, %v493
        %v665 = vsel %vm663, %v646, %v494
        %v666 = vsel %vm663, %v648, 0.0
        %v667 = vmax.f32 %v496, %v666
        %s668 = scalar_lea.vmem %s211, 64 [#allocation4]
        %v669 = vld [vmem:[%s668] sm:$0xff]
        %v670 = vld [vmem:[%s668 + $0x8] sm:$0xff]
        %v671 = vld [vmem:[%s668 + $0x10] sm:$0xff]
        %v672 = vld [vmem:[%s668 + $0x18] sm:$0xff]
        %673 = vmatpush.msra.mxu0 %v319
        %674 = vmatpush.msra.mxu0 %v315
        %675 = vmatpush.msra.mxu0 %v311
        %676 = vmatpush.msra.mxu0 %v307
        %677 = vmatpush.msra.mxu0 %v303
        %678 = vmatpush.msra.mxu0 %v299
        %679 = vmatpush.msra.mxu0 %v295
        %680 = vmatpush.msra.mxu0 %v291
        %681 = vmatpush.msra.mxu0 %v287
        %682 = vmatpush.msra.mxu0 %v283
        %683 = vmatpush.msra.mxu0 %v279
        %684 = vmatpush.msra.mxu0 %v275
        %685 = vmatpush.msra.mxu0 %v271
        %686 = vmatpush.msra.mxu0 %v267
        %687 = vmatpush.msra.mxu0 %v263
        %688 = vmatpush.msra.mxu0 %v259
        %689 = vmatmul.f32.gmra.mxu0 %v664
        %v690 = vpop.f32.mrf.mxu0
        %v691 = vadd.f32 0.0, %v690
        %692 = vdwg.mxu0
        %693 = vmatpush.msra.mxu0 %v320
        %694 = vmatpush.msra.mxu0 %v316
        %695 = vmatpush.msra.mxu0 %v312
        %696 = vmatpush.msra.mxu0 %v308
        %697 = vmatpush.msra.mxu0 %v304
        %698 = vmatpush.msra.mxu0 %v300
        %699 = vmatpush.msra.mxu0 %v296
        %700 = vmatpush.msra.mxu0 %v292
        %701 = vmatpush.msra.mxu0 %v288
        %702 = vmatpush.msra.mxu0 %v284
        %703 = vmatpush.msra.mxu0 %v280
        %704 = vmatpush.msra.mxu0 %v276
        %705 = vmatpush.msra.mxu0 %v272
        %706 = vmatpush.msra.mxu0 %v268
        %707 = vmatpush.msra.mxu0 %v264
        %708 = vmatpush.msra.mxu0 %v260
        %709 = vmatmul.f32.gmra.mxu0 %v664
        %v710 = vpop.f32.mrf.mxu0
        %v711 = vadd.f32 0.0, %v710
        %712 = vdwg.mxu0
        %713 = vmatpush.msra.mxu0 %v321
        %714 = vmatpush.msra.mxu0 %v317
        %715 = vmatpush.msra.mxu0 %v313
        %716 = vmatpush.msra.mxu0 %v309
        %717 = vmatpush.msra.mxu0 %v305
        %718 = vmatpush.msra.mxu0 %v301
        %719 = vmatpush.msra.mxu0 %v297
        %720 = vmatpush.msra.mxu0 %v293
        %721 = vmatpush.msra.mxu0 %v289
        %722 = vmatpush.msra.mxu0 %v285
        %723 = vmatpush.msra.mxu0 %v281
        %724 = vmatpush.msra.mxu0 %v277
        %725 = vmatpush.msra.mxu0 %v273
        %726 = vmatpush.msra.mxu0 %v269
        %727 = vmatpush.msra.mxu0 %v265
        %728 = vmatpush.msra.mxu0 %v261
        %729 = vmatmul.f32.gmra.mxu0 %v664
        %v730 = vpop.f32.mrf.mxu0
        %v731 = vadd.f32 0.0, %v730
        %732 = vdwg.mxu0
        %733 = vmatpush.msra.mxu0 %v322
        %734 = vmatpush.msra.mxu0 %v318
        %735 = vmatpush.msra.mxu0 %v314
        %736 = vmatpush.msra.mxu0 %v310
        %737 = vmatpush.msra.mxu0 %v306
        %738 = vmatpush.msra.mxu0 %v302
        %739 = vmatpush.msra.mxu0 %v298
        %740 = vmatpush.msra.mxu0 %v294
        %741 = vmatpush.msra.mxu0 %v290
        %742 = vmatpush.msra.mxu0 %v286
        %743 = vmatpush.msra.mxu0 %v282
        %744 = vmatpush.msra.mxu0 %v278
        %745 = vmatpush.msra.mxu0 %v274
        %746 = vmatpush.msra.mxu0 %v270
        %747 = vmatpush.msra.mxu0 %v266
        %748 = vmatpush.msra.mxu0 %v262
        %749 = vmatmul.f32.gmra.mxu0 %v664
        %v750 = vpop.f32.mrf.mxu0
        %v751 = vadd.f32 0.0, %v750
        %752 = vdwg.mxu0
        %v753 = vadd.f32 %v669, %v691
        %v754 = vadd.f32 %v670, %v711
        %v755 = vadd.f32 %v671, %v731
        %v756 = vadd.f32 %v672, %v751
        %v757 = vxor.u32 %v753, 2147483648
        %v758 = vmul.f32 %v757, 1.442695
        %v759 = vpow.pop %v758
        %v760 = vadd.f32 %v759, 1.0
        %v761 = vrcp.pop %v760
        %v762 = vmul.f32 %v760, %v761
        %v763 = vsub.f32 1.0, %v762
        %v764 = vmul.f32 %v761, %v763
        %v765 = vadd.f32 %v761, %v764
        %vm766 = vweird.f32 %v760
        %vm767 = vweird.f32 %v761
        %vm768 = vmor %vm766, %vm767
        %v769 = vsel %vm768, %v761, %v765
        %v770 = vand.u32 2147483647, %v760
        %vm771 = vcmp.eq.f32.partialorder %v770, 8.507059e+37
        %v772 = vand.u32 %v760, 2147483648
        %v773 = vor.u32 1.1754944e-38, %v772
        %v774 = vsel %vm771, %v773, %v769
        %v775 = vmul.f32 1.0, %v774
        %v776 = vxor.u32 %v754, 2147483648
        %v777 = vmul.f32 %v776, 1.442695
        %v778 = vpow.pop %v777
        %v779 = vadd.f32 %v778, 1.0
        %v780 = vrcp.pop %v779
        %v781 = vmul.f32 %v779, %v780
        %v782 = vsub.f32 1.0, %v781
        %v783 = vmul.f32 %v780, %v782
        %v784 = vadd.f32 %v780, %v783
        %vm785 = vweird.f32 %v779
        %vm786 = vweird.f32 %v780
        %vm787 = vmor %vm785, %vm786
        %v788 = vsel %vm787, %v780, %v784
        %v789 = vand.u32 2147483647, %v779
        %vm790 = vcmp.eq.f32.partialorder %v789, 8.507059e+37
        %v791 = vand.u32 %v779, 2147483648
        %v792 = vor.u32 1.1754944e-38, %v791
        %v793 = vsel %vm790, %v792, %v788
        %v794 = vmul.f32 1.0, %v793
        %v795 = vtanh.pop %v755
        %v796 = vxor.u32 %v756, 2147483648
        %v797 = vmul.f32 %v796, 1.442695
        %v798 = vpow.pop %v797
        %v799 = vadd.f32 %v798, 1.0
        %v800 = vrcp.pop %v799
        %v801 = vmul.f32 %v799, %v800
        %v802 = vsub.f32 1.0, %v801
        %v803 = vmul.f32 %v800, %v802
        %v804 = vadd.f32 %v800, %v803
        %vm805 = vweird.f32 %v799
        %vm806 = vweird.f32 %v800
        %vm807 = vmor %vm805, %vm806
        %v808 = vsel %vm807, %v800, %v804
        %v809 = vand.u32 2147483647, %v799
        %vm810 = vcmp.eq.f32.partialorder %v809, 8.507059e+37
        %v811 = vand.u32 %v799, 2147483648
        %v812 = vor.u32 1.1754944e-38, %v811
        %v813 = vsel %vm810, %v812, %v808
        %v814 = vmul.f32 1.0, %v813
        %v815 = vmul.f32 %v794, %v665
        %v816 = vmul.f32 %v775, %v795
        %v817 = vadd.f32 %v815, %v816
        %v818 = vtanh.pop %v817
        %v819 = vmul.f32 %v814, %v818
        %s820 = sadd.s32 %s323, 2
        %s821 = ssub.s32 5, %s323
        %s822 = scalar_select %p478, %s820, %s821
        %p823 = scmp.ge.s32.totalorder %s822, 0
        %v824 = vstv %s822
        %vm825 = vcmp.lt.s32.totalorder %v824, %v258
        %s826 = scalar_select %p823, 1, 0
        %v827 = vstv %s826
        %vm828 = vcmp.eq.s32.totalorder %v827, 1
        %vm829 = vmand %vm828, %vm825
        %v830 = vsel %vm829, 1, 0
        %831 = vset.pattern.permute.xlu0 0
        %832 = vperm.xlu0 %831, %v830
        %v833 = vpop.permute.xlu0 %832
        %vm834 = vcmp.eq.s32.totalorder %v833, 1
        %v835 = vsel %vm834, %v819, %v664
        %v836 = vsel %vm834, %v817, %v665
        %v837 = vsel %vm834, %v819, 0.0
        %v838 = vmax.f32 %v667, %v837
        %s839 = scalar_lea.vmem %s211, 96 [#allocation4]
        %v840 = vld [vmem:[%s839] sm:$0xff]
        %v841 = vld [vmem:[%s839 + $0x8] sm:$0xff]
        %v842 = vld [vmem:[%s839 + $0x10] sm:$0xff]
        %v843 = vld [vmem:[%s839 + $0x18] sm:$0xff]
        %844 = vmatpush.msra.mxu0 %v319
        %845 = vmatpush.msra.mxu0 %v315
        %846 = vmatpush.msra.mxu0 %v311
        %847 = vmatpush.msra.mxu0 %v307
        %848 = vmatpush.msra.mxu0 %v303
        %849 = vmatpush.msra.mxu0 %v299
        %850 = vmatpush.msra.mxu0 %v295
        %851 = vmatpush.msra.mxu0 %v291
        %852 = vmatpush.msra.mxu0 %v287
        %853 = vmatpush.msra.mxu0 %v283
        %854 = vmatpush.msra.mxu0 %v279
        %855 = vmatpush.msra.mxu0 %v275
        %856 = vmatpush.msra.mxu0 %v271
        %857 = vmatpush.msra.mxu0 %v267
        %858 = vmatpush.msra.mxu0 %v263
        %859 = vmatpush.msra.mxu0 %v259
        %860 = vmatmul.f32.gmra.mxu0 %v835
        %v861 = vpop.f32.mrf.mxu0
        %v862 = vadd.f32 0.0, %v861
        %863 = vdwg.mxu0
        %864 = vmatpush.msra.mxu0 %v320
        %865 = vmatpush.msra.mxu0 %v316
        %866 = vmatpush.msra.mxu0 %v312
        %867 = vmatpush.msra.mxu0 %v308
        %868 = vmatpush.msra.mxu0 %v304
        %869 = vmatpush.msra.mxu0 %v300
        %870 = vmatpush.msra.mxu0 %v296
        %871 = vmatpush.msra.mxu0 %v292
        %872 = vmatpush.msra.mxu0 %v288
        %873 = vmatpush.msra.mxu0 %v284
        %874 = vmatpush.msra.mxu0 %v280
        %875 = vmatpush.msra.mxu0 %v276
        %876 = vmatpush.msra.mxu0 %v272
        %877 = vmatpush.msra.mxu0 %v268
        %878 = vmatpush.msra.mxu0 %v264
        %879 = vmatpush.msra.mxu0 %v260
        %880 = vmatmul.f32.gmra.mxu0 %v835
        %v881 = vpop.f32.mrf.mxu0
        %v882 = vadd.f32 0.0, %v881
        %883 = vdwg.mxu0
        %884 = vmatpush.msra.mxu0 %v321
        %885 = vmatpush.msra.mxu0 %v317
        %886 = vmatpush.msra.mxu0 %v313
        %887 = vmatpush.msra.mxu0 %v309
        %888 = vmatpush.msra.mxu0 %v305
        %889 = vmatpush.msra.mxu0 %v301
        %890 = vmatpush.msra.mxu0 %v297
        %891 = vmatpush.msra.mxu0 %v293
        %892 = vmatpush.msra.mxu0 %v289
        %893 = vmatpush.msra.mxu0 %v285
        %894 = vmatpush.msra.mxu0 %v281
        %895 = vmatpush.msra.mxu0 %v277
        %896 = vmatpush.msra.mxu0 %v273
        %897 = vmatpush.msra.mxu0 %v269
        %898 = vmatpush.msra.mxu0 %v265
        %899 = vmatpush.msra.mxu0 %v261
        %900 = vmatmul.f32.gmra.mxu0 %v835
        %v901 = vpop.f32.mrf.mxu0
        %v902 = vadd.f32 0.0, %v901
        %903 = vdwg.mxu0
        %904 = vmatpush.msra.mxu0 %v322
        %905 = vmatpush.msra.mxu0 %v318
        %906 = vmatpush.msra.mxu0 %v314
        %907 = vmatpush.msra.mxu0 %v310
        %908 = vmatpush.msra.mxu0 %v306
        %909 = vmatpush.msra.mxu0 %v302
        %910 = vmatpush.msra.mxu0 %v298
        %911 = vmatpush.msra.mxu0 %v294
        %912 = vmatpush.msra.mxu0 %v290
        %913 = vmatpush.msra.mxu0 %v286
        %914 = vmatpush.msra.mxu0 %v282
        %915 = vmatpush.msra.mxu0 %v278
        %916 = vmatpush.msra.mxu0 %v274
        %917 = vmatpush.msra.mxu0 %v270
        %918 = vmatpush.msra.mxu0 %v266
        %919 = vmatpush.msra.mxu0 %v262
        %920 = vmatmul.f32.gmra.mxu0 %v835
        %v921 = vpop.f32.mrf.mxu0
        %v922 = vadd.f32 0.0, %v921
        %923 = vdwg.mxu0
        %v924 = vadd.f32 %v840, %v862
        %v925 = vadd.f32 %v841, %v882
        %v926 = vadd.f32 %v842, %v902
        %v927 = vadd.f32 %v843, %v922
        %v928 = vxor.u32 %v924, 2147483648
        %v929 = vmul.f32 %v928, 1.442695
        %v930 = vpow.pop %v929
        %v931 = vadd.f32 %v930, 1.0
        %v932 = vrcp.pop %v931
        %v933 = vmul.f32 %v931, %v932
        %v934 = vsub.f32 1.0, %v933
        %v935 = vmul.f32 %v932, %v934
        %v936 = vadd.f32 %v932, %v935
        %vm937 = vweird.f32 %v931
        %vm938 = vweird.f32 %v932
        %vm939 = vmor %vm937, %vm938
        %v940 = vsel %vm939, %v932, %v936
        %v941 = vand.u32 2147483647, %v931
        %vm942 = vcmp.eq.f32.partialorder %v941, 8.507059e+37
        %v943 = vand.u32 %v931, 2147483648
        %v944 = vor.u32 1.1754944e-38, %v943
        %v945 = vsel %vm942, %v944, %v940
        %v946 = vmul.f32 1.0, %v945
        %v947 = vxor.u32 %v925, 2147483648
        %v948 = vmul.f32 %v947, 1.442695
        %v949 = vpow.pop %v948
        %v950 = vadd.f32 %v949, 1.0
        %v951 = vrcp.pop %v950
        %v952 = vmul.f32 %v950, %v951
        %v953 = vsub.f32 1.0, %v952
        %v954 = vmul.f32 %v951, %v953
        %v955 = vadd.f32 %v951, %v954
        %vm956 = vweird.f32 %v950
        %vm957 = vweird.f32 %v951
        %vm958 = vmor %vm956, %vm957
        %v959 = vsel %vm958, %v951, %v955
        %v960 = vand.u32 2147483647, %v950
        %vm961 = vcmp.eq.f32.partialorder %v960, 8.507059e+37
        %v962 = vand.u32 %v950, 2147483648
        %v963 = vor.u32 1.1754944e-38, %v962
        %v964 = vsel %vm961, %v963, %v959
        %v965 = vmul.f32 1.0, %v964
        %v966 = vtanh.pop %v926
        %v967 = vxor.u32 %v927, 2147483648
        %v968 = vmul.f32 %v967, 1.442695
        %v969 = vpow.pop %v968
        %v970 = vadd.f32 %v969, 1.0
        %v971 = vrcp.pop %v970
        %v972 = vmul.f32 %v970, %v971
        %v973 = vsub.f32 1.0, %v972
        %v974 = vmul.f32 %v971, %v973
        %v975 = vadd.f32 %v971, %v974
        %vm976 = vweird.f32 %v970
        %vm977 = vweird.f32 %v971
        %vm978 = vmor %vm976, %vm977
        %v979 = vsel %vm978, %v971, %v975
        %v980 = vand.u32 2147483647, %v970
        %vm981 = vcmp.eq.f32.partialorder %v980, 8.507059e+37
        %v982 = vand.u32 %v970, 2147483648
        %v983 = vor.u32 1.1754944e-38, %v982
        %v984 = vsel %vm981, %v983, %v979
        %v985 = vmul.f32 1.0, %v984
        %v986 = vmul.f32 %v965, %v836
        %v987 = vmul.f32 %v946, %v966
        %v988 = vadd.f32 %v986, %v987
        %v989 = vtanh.pop %v988
        %v990 = vmul.f32 %v985, %v989
        %s991 = sadd.s32 %s323, 3
        %s992 = ssub.s32 4, %s323
        %s993 = scalar_select %p478, %s991, %s992
        %p994 = scmp.ge.s32.totalorder %s993, 0
        %v995 = vstv %s993
        %vm996 = vcmp.lt.s32.totalorder %v995, %v258
        %s997 = scalar_select %p994, 1, 0
        %v998 = vstv %s997
        %vm999 = vcmp.eq.s32.totalorder %v998, 1
        %vm1000 = vmand %vm999, %vm996
        %v1001 = vsel %vm1000, 1, 0
        %1002 = vset.pattern.permute.xlu0 0
        %1003 = vperm.xlu0 %1002, %v1001
        %v1004 = vpop.permute.xlu0 %1003
        %vm1005 = vcmp.eq.s32.totalorder %v1004, 1
        %v1006 = vsel %vm1005, %v990, %v835
        %v1007 = vsel %vm1005, %v988, %v836
        %v1008 = vsel %vm1005, %v990, 0.0
        %v1009 = vmax.f32 %v838, %v1008
        %1010 = vst [vmem:[#allocation2] sm:$0xff] %v1006
        %1011 = vst [vmem:[#allocation3] sm:$0xff] %v1007
        %1012 = vst [vmem:[%s249] sm:$0xff] %v1009
        %s1013 = sand.u32 %s118, 1
        %s1014 = scalar_lea.sflag [#allocation6], %s1013
        %s1015 = sand.u32 %s118, 1
        %s1016 = smul.addr %s1015, 8
        %s1017 = scalar_lea.vmem [#allocation9], %s1016
        // Predicated region
        $region45: #{tpu_custom_call.1} parent=31 // pred_check
          %p1018 = pneg %p128
        $region46: #{tpu_custom_call.1} parent=31 // pred_check_branch
          %1020 = sbr.rel (%p1018) target = $region48
        $region47: #{tpu_custom_call.1} parent=31 // pred_region
          %1022 = vsyncadd %s1014, 0
          %s1023 = smul.addr %s27, 8
          %s1024 = scalar_lea.hbm %s3, %s1023
          %s1026 = sshll.u32 %s1017, 4
          %s1027 = int_to_ptr.vmem [resolvable:$true] %s1026
          %s1028 = sshll.u32 %s1024, 4
          %s1029 = int_to_ptr.hbm [resolvable:$true] %s1028
          %1031 = dma.vmem_to_hbm [thread:$0]  %s1027, 128, %s1029, %s1014
        $region48: #{tpu_custom_call.1} parent=31 // pred_fallthru
          _
      $region32: #{tpu_custom_call.1} parent=5 // pred_fallthru
        _
      %p1032 = scmp.le.s32.totalorder 2, %s18
      // Predicated region
      $region49: #{tpu_custom_call.1} parent=5 // pred_check
        %p1033 = pneg %p1032
      $region50: #{tpu_custom_call.1} parent=5 // pred_check_branch
        %1035 = sbr.rel (%p1033) target = $region52
      $region51: #{tpu_custom_call.1} parent=5 // pred_region
        %s1036 = ssub.s32 %s18, 2
        // Predicated region
        $region53: #{tpu_custom_call.1} parent=51 // pred_check
          %p1037 = pneg %p134
        $region54: #{tpu_custom_call.1} parent=51 // pred_check_branch
          %1039 = sbr.rel (%p1037) target = $region56
        $region55: #{tpu_custom_call.1} parent=51 // pred_region
          %s1040 = sand.u32 %s119, 1
          %s1041 = scalar_lea.sflag [#allocation6], %s1040
          %s1042 = sand.u32 %s119, 1
          %s1043 = smul.addr %s1042, 8
          %s1044 = scalar_lea.vmem [#allocation9], %s1043
          %1046 = dma.done %s1041, 128
        $region56: #{tpu_custom_call.1} parent=51 // pred_fallthru
          _
      $region52: #{tpu_custom_call.1} parent=5 // pred_fallthru
        _
    $region6: #{tpu_custom_call.1} parent=1 // loop_footer
      %s22 = sadd.s32 1, %s18
    $region7: #{tpu_custom_call.1} parent=1 // loop_footer_branch
      %17 = sbr.rel target = $region3
    $region8: #{tpu_custom_call.1} parent=1 // loop_exit
      _
    %1047 = vsyncpa [#allocation5], 1
    %s1048 = scalar_lea.sflag [#allocation5], 1
    %1049 = vsyncpa %s1048, 1
    %1050 = vsyncpa [#allocation8], 1
    %s1051 = scalar_lea.sflag [#allocation8], 1
    %1052 = vsyncpa %s1051, 1
    %1053 = vsyncpa [#allocation6], 1
    %s1054 = scalar_lea.sflag [#allocation6], 1
    %1055 = vsyncpa %s1054, 1

</llo_original>
